<compile_context>
chip_gen: v7x
topology: tpu7x:2x2x1
jax: 0.10.0
libtpu: 0.0.40
codegen_flags: <defaults>
</compile_context>

<pallas_src>
import random

import jax
import jax.numpy as jnp
from jax import lax
from jax.experimental import pallas as pl
from jax.experimental.pallas import tpu as pltpu


# ---------------------------------------------------------------------------
# Shared in-kernel LSTM gate math (gates: [B, 4H] f32, c: [B, H] f32)
# ---------------------------------------------------------------------------
def _gate_nonlin(gates, c, H):
    i_g = jax.nn.sigmoid(gates[:, 0 * H:1 * H])
    f_g = jax.nn.sigmoid(gates[:, 1 * H:2 * H])
    g_g = jnp.tanh(gates[:, 2 * H:3 * H])
    o_g = jax.nn.sigmoid(gates[:, 3 * H:4 * H])
    c_new = f_g * c + i_g * g_g
    h_new = o_g * jnp.tanh(c_new)
    return h_new, c_new


# ---------------------------------------------------------------------------
# Encoder kernel: whole LSTM recurrence over the source sequence.
#   - time-parallel input projection hoisted to one big MXU matmul (prologue)
#   - only h @ W_hh remains on the serial critical path
# ---------------------------------------------------------------------------
def encoder_kernel(emb2d_ref,            # [T*B, E]  bf16
                   w_ih_ref,             # [E, 4H]   bf16
                   w_hh_ref,             # [H, 4H]   bf16
                   b_ref,                # [1, 4H]   f32
                   h_out_ref, c_out_ref, # [B, H]    f32
                   pre_ref):             # scratch [T*B, 4H] f32
    TB = emb2d_ref.shape[0]
    B, H = h_out_ref.shape
    T = TB // B

    # Hoisted time-parallel x-projection + bias: one [T*B,E] x [E,4H] matmul.
    pre_ref[...] = (
        jnp.dot(emb2d_ref[...], w_ih_ref[...], preferred_element_type=jnp.float32)
        + b_ref[...])

    def step(t, carry):
        h, c = carry
        off = pl.multiple_of(t * B, B)
        gates = pre_ref[pl.ds(off, B), :] + jnp.dot(
            h.astype(jnp.bfloat16), w_hh_ref[...],
            preferred_element_type=jnp.float32)
        return _gate_nonlin(gates, c, H)

    h0 = jnp.zeros((B, H), jnp.float32)
    c0 = jnp.zeros((B, H), jnp.float32)
    h, c = lax.fori_loop(0, T, step, (h0, c0))
    h_out_ref[...] = h
    c_out_ref[...] = c


def run_encoder(src_emb2d, w_ih, w_hh, b, *, batch):
    TB, E = src_emb2d.shape
    H = w_hh.shape[0]
    B = batch
    assert TB % B == 0 and B % 8 == 0 and H % 128 == 0 and E % 128 == 0, \
        "pad batch to a multiple of 8 and embed/hidden to multiples of 128"
    vmem = pl.BlockSpec(memory_space=pltpu.MemorySpace.VMEM)
    return pl.pallas_call(
        encoder_kernel,
        out_shape=(jax.ShapeDtypeStruct((B, H), jnp.float32),
                   jax.ShapeDtypeStruct((B, H), jnp.float32)),
        in_specs=[vmem] * 4,
        out_specs=(vmem, vmem),
        scratch_shapes=[pltpu.VMEM((TB, 4 * H), jnp.float32)],
    )(src_emb2d, w_ih, w_hh, b)


# ---------------------------------------------------------------------------
# Fused decoder kernel: ALL timesteps in one kernel.
#   - weights + embedding table VMEM-resident for the whole decode
#   - in-kernel embedding (one-hot @ fused table), argmax and teacher-forcing select
#   - per-step logits written to out_ref[i]; out_ref[0] stays zero like the reference
# ---------------------------------------------------------------------------
def decoder_kernel(tf_mask_ref,          # SMEM [T]       f32 (1.0 = teacher forcing)
                   tgt_ids_ref,          # VMEM [T, B, 1] int32
                   h0_ref, c0_ref,       # VMEM [B, H]    f32
                   dec_embed_ref,        # VMEM [V, E]    bf16
                   w_ih_ref,             # VMEM [E, 4H]   bf16
                   w_hh_ref,             # VMEM [H, 4H]   bf16
                   b_ref,                # VMEM [1, 4H]   f32
                   w_fc_ref,             # VMEM [H, V]    bf16
                   b_fc_ref,             # VMEM [1, V]    f32
                   out_ref,              # VMEM [T, B, V] f32
                   emb_proj_ref):        # scratch [V, 4H] bf16
    T, B, V = out_ref.shape
    H = h0_ref.shape[1]

    # Prologue (hoisted out of the recurrence): fuse embedding lookup + input
    # projection + gate bias into one table so that
    #   one_hot(x) @ emb_proj == embed(x) @ W_ih + b
    emb_proj_ref[...] = (
        jnp.dot(dec_embed_ref[...], w_ih_ref[...], preferred_element_type=jnp.float32)
        + b_ref[...]).astype(jnp.bfloat16)

    lane_v = lax.broadcasted_iota(jnp.int32, (B, V), 1)
    b_fc = jnp.broadcast_to(b_fc_ref[...], (B, V))   # hoisted broadcast

    # outputs[0] is never written by the PyTorch reference -> stays zero.
    out_ref[0] = jnp.zeros((B, V), jnp.float32)

    def step(i, carry):
        h, c, x_oh = carry
        gates = (
            jnp.dot(x_oh, emb_proj_ref[...], preferred_element_type=jnp.float32)
            + jnp.dot(h.astype(jnp.bfloat16), w_hh_ref[...],
                      preferred_element_type=jnp.float32))
        h_new, c_new = _gate_nonlin(gates, c, H)
        logits = jnp.dot(h_new.astype(jnp.bfloat16), w_fc_ref[...],
                         preferred_element_type=jnp.float32) + b_fc
        out_ref[i] = logits

        # greedy argmax (first max, like torch.argmax) expressed as a one-hot
        m = jnp.max(logits, axis=-1, keepdims=True)
        first_max = jnp.min(jnp.where(logits == m, lane_v, V),
                            axis=-1, keepdims=True)          # [B, 1] int32
        bg_oh = (lane_v == first_max).astype(jnp.float32)
        teach_oh = (lane_v == tgt_ids_ref[i]).astype(jnp.float32)

        tf = tf_mask_ref[i]                                   # scalar from SMEM
        x_oh_next = (tf * teach_oh + (1.0 - tf) * bg_oh).astype(jnp.bfloat16)
        return h_new, c_new, x_oh_next

    x_oh0 = (lane_v == tgt_ids_ref[0]).astype(jnp.float32).astype(jnp.bfloat16)
    lax.fori_loop(1, T, step, (h0_ref[...], c0_ref[...], x_oh0))


def run_decoder(tf_mask, target_ids, h0, c0,
                dec_embed, w_ih, w_hh, b, w_fc, b_fc):
    T, B = target_ids.shape
    H = h0.shape[1]
    V = w_fc.shape[1]
    E = dec_embed.shape[1]
    assert B % 8 == 0 and H % 128 == 0 and V % 128 == 0 and E % 128 == 0, \
        "pad batch to a multiple of 8 and embed/hidden/vocab to multiples of 128"
    assert dec_embed.shape[0] == V
    vmem = pl.BlockSpec(memory_space=pltpu.MemorySpace.VMEM)
    smem = pl.BlockSpec(memory_space=pltpu.MemorySpace.SMEM)
    return pl.pallas_call(
        decoder_kernel,
        out_shape=jax.ShapeDtypeStruct((T, B, V), jnp.float32),
        in_specs=[smem] + [vmem] * 9,
        out_specs=vmem,
        scratch_shapes=[pltpu.VMEM((V, 4 * H), jnp.bfloat16)],
    )(tf_mask, target_ids[..., None], h0, c0, dec_embed, w_ih, w_hh, b, w_fc, b_fc)


# ---------------------------------------------------------------------------
# Whole forward is one jitted program (encoder kernel + fused decoder kernel).
# ---------------------------------------------------------------------------
@jax.jit
def seq2seq_forward(params, source, target, tf_mask):
    B = source.shape[1]
    # Source embedding gather is a one-shot, time-parallel op: do it in XLA,
    # already flattened to [T*B, E] for the hoisted encoder projection.
    src_emb2d = jnp.take(params["enc_embed"], source.reshape(-1), axis=0)
    h, c = run_encoder(src_emb2d, params["enc_w_ih"], params["enc_w_hh"],
                       params["enc_b"], batch=B)
    return run_decoder(tf_mask, target, h, c,
                       params["dec_embed"], params["dec_w_ih"], params["dec_w_hh"],
                       params["dec_b"], params["dec_fc_w"], params["dec_fc_b"])


class Seq2Seq:
    def __init__(self, params):
        self.p = params

    def forward(self, source, target, tfr=0.5):
        """source: [src_len, B] int32, target: [tgt_len, B] int32 -> [tgt_len, B, V] f32."""
        target_len = target.shape[0]
        # Host-side Python RNG with the same draw order as the PyTorch reference
        # (one random.random() per decode step i = 1..target_len-1); the *selection*
        # itself happens inside the fused kernel, so the forward stays jit-able.
        mask = [0.0] + [1.0 if random.random() < tfr else 0.0
                        for _ in range(1, target_len)]
        return seq2seq_forward(self.p, source, target,
                               jnp.asarray(mask, dtype=jnp.float32))


# ---------------------------------------------------------------------------
# Deterministic parameter init + example run
# ---------------------------------------------------------------------------
def init_params(key, src_vocab, tgt_vocab, embed_dim, hidden):
    ks = jax.random.split(key, 10)
    s = 0.1

    def n(k, shape, dtype=jnp.bfloat16):
        return (s * jax.random.normal(k, shape, jnp.float32)).astype(dtype)

    # Weights/embeddings bf16 (MXU-native, half the VMEM/DMA); biases f32.
    # NOTE: the single LSTM bias corresponds to torch's b_ih + b_hh summed.
    return {
        "enc_embed": n(ks[0], (src_vocab, embed_dim)),
        "enc_w_ih":  n(ks[1], (embed_dim, 4 * hidden)),
        "enc_w_hh":  n(ks[2], (hidden, 4 * hidden)),
        "enc_b":     n(ks[3], (1, 4 * hidden), jnp.float32),
        "dec_embed": n(ks[4], (tgt_vocab, embed_dim)),
        "dec_w_ih":  n(ks[5], (embed_dim, 4 * hidden)),
        "dec_w_hh":  n(ks[6], (hidden, 4 * hidden)),
        "dec_b":     n(ks[7], (1, 4 * hidden), jnp.float32),
        "dec_fc_w":  n(ks[8], (hidden, tgt_vocab)),
        "dec_fc_b":  n(ks[9], (1, tgt_vocab), jnp.float32),
    }


if __name__ == "__main__":
    random.seed(0)                       # deterministic teacher-forcing draws
    key = jax.random.PRNGKey(0)
    k_par, k_src, k_tgt = jax.random.split(key, 3)

    # Small but tile-aligned shapes: batch multiple of 8 (sublanes),
    # embed / hidden / vocab multiples of 128 (lanes).
    SRC_LEN, TGT_LEN, BATCH = 8, 8, 8
    EMBED, HIDDEN = 128, 128
    SRC_VOCAB, TGT_VOCAB = 128, 128
    # TODO(synk): the undefined global `fr_field.vocab` in the reference is replaced
    # by the in-script TGT_VOCAB constant.

    params = init_params(k_par, SRC_VOCAB, TGT_VOCAB, EMBED, HIDDEN)
    source = jax.random.randint(k_src, (SRC_LEN, BATCH), 0, SRC_VOCAB, dtype=jnp.int32)
    target = jax.random.randint(k_tgt, (TGT_LEN, BATCH), 0, TGT_VOCAB, dtype=jnp.int32)

    model = Seq2Seq(params)
    outputs = model.forward(source, target, tfr=0.5)
    jax.block_until_ready(outputs)

    assert outputs.shape == (TGT_LEN, BATCH, TGT_VOCAB)
    assert bool(jnp.all(outputs[0] == 0.0))          # first timestep left as zeros
    assert bool(jnp.all(jnp.isfinite(outputs)))
    print("KERNEL_OK")
</pallas_src>

<mosaic_0001>
module attributes {stable_mosaic.version = 11 : i64} {
  func.func @encoder_kernel(%arg0: memref<64x128xbf16, #tpu.memory_space<vmem>>, %arg1: memref<128x512xbf16, #tpu.memory_space<vmem>>, %arg2: memref<128x512xbf16, #tpu.memory_space<vmem>>, %arg3: memref<1x512xf32, #tpu.memory_space<vmem>>, %arg4: memref<8x128xf32, #tpu.memory_space<vmem>>, %arg5: memref<8x128xf32, #tpu.memory_space<vmem>>, %arg6: memref<64x512xf32, #tpu.memory_space<vmem>>) attributes {dimension_semantics = [], scalar_prefetch = 0 : i64, scratch_operands = 1 : i64, tpu.core_type = #tpu.core_type<tc>} {
    %c0 = arith.constant 0 : index
    %c0_0 = arith.constant 0 : index
    %0 = vector.load %arg0[%c0, %c0_0] : memref<64x128xbf16, #tpu.memory_space<vmem>>, vector<64x128xbf16>
    %c0_1 = arith.constant 0 : index
    %c0_2 = arith.constant 0 : index
    %1 = vector.load %arg1[%c0_1, %c0_2] : memref<128x512xbf16, #tpu.memory_space<vmem>>, vector<128x512xbf16>
    %cst = arith.constant dense<0.000000e+00> : vector<64x512xf32>
    %2 = tpu.matmul %0, %1, %cst {dimension_numbers = #tpu.dot_dimension_numbers<[1], [0], [0], [1], [0, 0, 1, 1], [], []>} : vector<64x128xbf16>, vector<128x512xbf16>, vector<64x512xf32> -> vector<64x512xf32>
    %c0_3 = arith.constant 0 : index
    %c0_4 = arith.constant 0 : index
    %3 = vector.load %arg3[%c0_3, %c0_4] : memref<1x512xf32, #tpu.memory_space<vmem>>, vector<1x512xf32>
    %4 = vector.broadcast %3 : vector<1x512xf32> to vector<64x512xf32>
    %5 = arith.addf %2, %4 : vector<64x512xf32>
    %c0_5 = arith.constant 0 : index
    %c0_6 = arith.constant 0 : index
    %6 = vector.load %arg6[%c0_5, %c0_6] : memref<64x512xf32, #tpu.memory_space<vmem>>, vector<64x512xf32>
    tpu.vector_store %arg6[%c0_5, %c0_6], %5 {strides = array<i32>} : memref<64x512xf32, #tpu.memory_space<vmem>>, vector<64x512xf32>,
    %cst_7 = arith.constant 0.000000e+00 : f32
    %7 = vector.broadcast %cst_7 : f32 to vector<8x128xf32>
    %cst_8 = arith.constant 0.000000e+00 : f32
    %8 = vector.broadcast %cst_8 : f32 to vector<8x128xf32>
    %c0_i32 = arith.constant 0 : i32
    %c8_i32 = arith.constant 8 : i32
    %9 = arith.addi %c0_i32, %c8_i32 : i32
    %c1_i32 = arith.constant 1 : i32
    %10:2 = scf.for %arg7 = %c0_i32 to %9 step %c1_i32 iter_args(%arg8 = %7, %arg9 = %8) -> (vector<8x128xf32>, vector<8x128xf32>)  : i32 {
      %c8_i32_14 = arith.constant 8 : i32
      %13 = arith.muli %arg7, %c8_i32_14 : i32
      %14 = tpu.assume_multiple %13, 8 : i32
      %15 = arith.index_cast %14 : i32 to index
      %c0_15 = arith.constant 0 : index
      %16 = vector.load %arg6[%15, %c0_15] : memref<64x512xf32, #tpu.memory_space<vmem>>, vector<8x512xf32>
      %17 = arith.truncf %arg8 : vector<8x128xf32> to vector<8x128xbf16>
      %c0_16 = arith.constant 0 : index
      %c0_17 = arith.constant 0 : index
      %18 = vector.load %arg2[%c0_16, %c0_17] : memref<128x512xbf16, #tpu.memory_space<vmem>>, vector<128x512xbf16>
      %cst_18 = arith.constant dense<0.000000e+00> : vector<8x512xf32>
      %19 = tpu.matmul %17, %18, %cst_18 {dimension_numbers = #tpu.dot_dimension_numbers<[1], [0], [0], [1], [0, 0, 1, 1], [], []>} : vector<8x128xbf16>, vector<128x512xbf16>, vector<8x512xf32> -> vector<8x512xf32>
      %20 = arith.addf %16, %19 : vector<8x512xf32>
      %21 = vector.extract_strided_slice %20 {offsets = [0, 0], sizes = [8, 128], strides = [1, 1]} : vector<8x512xf32> to vector<8x128xf32>
      %22 = arith.negf %21 : vector<8x128xf32>
      %23 = math.exp %22 : vector<8x128xf32>
      %cst_19 = arith.constant 1.000000e+00 : f32
      %24 = vector.broadcast %cst_19 : f32 to vector<8x128xf32>
      %25 = arith.addf %24, %23 : vector<8x128xf32>
      %26 = arith.divf %24, %25 : vector<8x128xf32>
      %27 = vector.extract_strided_slice %20 {offsets = [0, 128], sizes = [8, 128], strides = [1, 1]} : vector<8x512xf32> to vector<8x128xf32>
      %28 = arith.negf %27 : vector<8x128xf32>
      %29 = math.exp %28 : vector<8x128xf32>
      %cst_20 = arith.constant 1.000000e+00 : f32
      %30 = vector.broadcast %cst_20 : f32 to vector<8x128xf32>
      %31 = arith.addf %30, %29 : vector<8x128xf32>
      %32 = arith.divf %30, %31 : vector<8x128xf32>
      %33 = vector.extract_strided_slice %20 {offsets = [0, 256], sizes = [8, 128], strides = [1, 1]} : vector<8x512xf32> to vector<8x128xf32>
      %34 = math.tanh %33 : vector<8x128xf32>
      %35 = vector.extract_strided_slice %20 {offsets = [0, 384], sizes = [8, 128], strides = [1, 1]} : vector<8x512xf32> to vector<8x128xf32>
      %36 = arith.negf %35 : vector<8x128xf32>
      %37 = math.exp %36 : vector<8x128xf32>
      %cst_21 = arith.constant 1.000000e+00 : f32
      %38 = vector.broadcast %cst_21 : f32 to vector<8x128xf32>
      %39 = arith.addf %38, %37 : vector<8x128xf32>
      %40 = arith.divf %38, %39 : vector<8x128xf32>
      %41 = arith.mulf %32, %arg9 : vector<8x128xf32>
      %42 = arith.mulf %26, %34 : vector<8x128xf32>
      %43 = arith.addf %41, %42 : vector<8x128xf32>
      %44 = math.tanh %43 : vector<8x128xf32>
      %45 = arith.mulf %40, %44 : vector<8x128xf32>
      scf.yield %45, %43 : vector<8x128xf32>, vector<8x128xf32>
    }
    %c8_i32_9 = arith.constant 8 : i32
    %c0_10 = arith.constant 0 : index
    %c0_11 = arith.constant 0 : index
    %11 = vector.load %arg4[%c0_10, %c0_11] : memref<8x128xf32, #tpu.memory_space<vmem>>, vector<8x128xf32>
    tpu.vector_store %arg4[%c0_10, %c0_11], %10#0 {strides = array<i32>} : memref<8x128xf32, #tpu.memory_space<vmem>>, vector<8x128xf32>,
    %c0_12 = arith.constant 0 : index
    %c0_13 = arith.constant 0 : index
    %12 = vector.load %arg5[%c0_12, %c0_13] : memref<8x128xf32, #tpu.memory_space<vmem>>, vector<8x128xf32>
    tpu.vector_store %arg5[%c0_12, %c0_13], %10#1 {strides = array<i32>} : memref<8x128xf32, #tpu.memory_space<vmem>>, vector<8x128xf32>,
    return
  }
}

module attributes {stable_mosaic.version = 11 : i64} {
  func.func @decoder_kernel(%arg0: memref<8xf32, #tpu.memory_space<smem>>, %arg1: memref<8x8x1xi32, #tpu.memory_space<vmem>>, %arg2: memref<8x128xf32, #tpu.memory_space<vmem>>, %arg3: memref<8x128xf32, #tpu.memory_space<vmem>>, %arg4: memref<128x128xbf16, #tpu.memory_space<vmem>>, %arg5: memref<128x512xbf16, #tpu.memory_space<vmem>>, %arg6: memref<128x512xbf16, #tpu.memory_space<vmem>>, %arg7: memref<1x512xf32, #tpu.memory_space<vmem>>, %arg8: memref<128x128xbf16, #tpu.memory_space<vmem>>, %arg9: memref<1x128xf32, #tpu.memory_space<vmem>>, %arg10: memref<8x8x128xf32, #tpu.memory_space<vmem>>, %arg11: memref<128x512xbf16, #tpu.memory_space<vmem>>) attributes {dimension_semantics = [], scalar_prefetch = 0 : i64, scratch_operands = 1 : i64, tpu.core_type = #tpu.core_type<tc>} {
    %c0 = arith.constant 0 : index
    %c0_0 = arith.constant 0 : index
    %0 = vector.load %arg4[%c0, %c0_0] : memref<128x128xbf16, #tpu.memory_space<vmem>>, vector<128x128xbf16>
    %c0_1 = arith.constant 0 : index
    %c0_2 = arith.constant 0 : index
    %1 = vector.load %arg5[%c0_1, %c0_2] : memref<128x512xbf16, #tpu.memory_space<vmem>>, vector<128x512xbf16>
    %cst = arith.constant dense<0.000000e+00> : vector<128x512xf32>
    %2 = tpu.matmul %0, %1, %cst {dimension_numbers = #tpu.dot_dimension_numbers<[1], [0], [0], [1], [0, 0, 1, 1], [], []>} : vector<128x128xbf16>, vector<128x512xbf16>, vector<128x512xf32> -> vector<128x512xf32>
    %c0_3 = arith.constant 0 : index
    %c0_4 = arith.constant 0 : index
    %3 = vector.load %arg7[%c0_3, %c0_4] : memref<1x512xf32, #tpu.memory_space<vmem>>, vector<1x512xf32>
    %4 = vector.broadcast %3 : vector<1x512xf32> to vector<128x512xf32>
    %5 = arith.addf %2, %4 : vector<128x512xf32>
    %6 = arith.truncf %5 : vector<128x512xf32> to vector<128x512xbf16>
    %c0_5 = arith.constant 0 : index
    %c0_6 = arith.constant 0 : index
    %7 = vector.load %arg11[%c0_5, %c0_6] : memref<128x512xbf16, #tpu.memory_space<vmem>>, vector<128x512xbf16>
    tpu.vector_store %arg11[%c0_5, %c0_6], %6 {strides = array<i32>} : memref<128x512xbf16, #tpu.memory_space<vmem>>, vector<128x512xbf16>,
    %8 = tpu.iota {dimensions = array<i32: 1>} : vector<8x128xi32>
    %c0_7 = arith.constant 0 : index
    %c0_8 = arith.constant 0 : index
    %9 = vector.load %arg9[%c0_7, %c0_8] : memref<1x128xf32, #tpu.memory_space<vmem>>, vector<1x128xf32>
    %10 = vector.shape_cast %9 : vector<1x128xf32> to vector<1x128xf32>
    %11 = vector.broadcast %10 : vector<1x128xf32> to vector<8x128xf32>
    %cst_9 = arith.constant 0.000000e+00 : f32
    %12 = vector.broadcast %cst_9 : f32 to vector<8x128xf32>
    %c0_10 = arith.constant 0 : index
    %c0_11 = arith.constant 0 : index
    %c0_12 = arith.constant 0 : index
    %13 = vector.load %arg10[%c0_10, %c0_11, %c0_12] : memref<8x8x128xf32, #tpu.memory_space<vmem>>, vector<1x8x128xf32>
    %14 = vector.shape_cast %13 : vector<1x8x128xf32> to vector<8x128xf32>
    %15 = vector.shape_cast %12 : vector<8x128xf32> to vector<1x8x128xf32>
    tpu.vector_store %arg10[%c0_10, %c0_11, %c0_12], %15 {strides = array<i32>} : memref<8x8x128xf32, #tpu.memory_space<vmem>>, vector<1x8x128xf32>,
    %c0_13 = arith.constant 0 : index
    %c0_14 = arith.constant 0 : index
    %c0_15 = arith.constant 0 : index
    %16 = vector.load %arg1[%c0_13, %c0_14, %c0_15] : memref<8x8x1xi32, #tpu.memory_space<vmem>>, vector<1x8x1xi32>
    %17 = vector.shape_cast %16 : vector<1x8x1xi32> to vector<8x1xi32>
    %18 = vector.broadcast %17 : vector<8x1xi32> to vector<8x128xi32>
    %19 = arith.cmpi eq, %8, %18 : vector<8x128xi32>
    %20 = arith.extui %19 : vector<8x128xi1> to vector<8x128xi32>
    %21 = arith.sitofp %20 : vector<8x128xi32> to vector<8x128xf32>
    %22 = arith.truncf %21 : vector<8x128xf32> to vector<8x128xbf16>
    %c0_16 = arith.constant 0 : index
    %c0_17 = arith.constant 0 : index
    %23 = vector.load %arg2[%c0_16, %c0_17] : memref<8x128xf32, #tpu.memory_space<vmem>>, vector<8x128xf32>
    %c0_18 = arith.constant 0 : index
    %c0_19 = arith.constant 0 : index
    %24 = vector.load %arg3[%c0_18, %c0_19] : memref<8x128xf32, #tpu.memory_space<vmem>>, vector<8x128xf32>
    %c1_i32 = arith.constant 1 : i32
    %c7_i32 = arith.constant 7 : i32
    %25 = arith.addi %c1_i32, %c7_i32 : i32
    %c1_i32_20 = arith.constant 1 : i32
    %26:3 = scf.for %arg12 = %c1_i32 to %25 step %c1_i32_20 iter_args(%arg13 = %23, %arg14 = %24, %arg15 = %22) -> (vector<8x128xf32>, vector<8x128xf32>, vector<8x128xbf16>)  : i32 {
      %c0_22 = arith.constant 0 : index
      %c0_23 = arith.constant 0 : index
      %27 = vector.load %arg11[%c0_22, %c0_23] : memref<128x512xbf16, #tpu.memory_space<vmem>>, vector<128x512xbf16>
      %cst_24 = arith.constant dense<0.000000e+00> : vector<8x512xf32>
      %28 = tpu.matmul %arg15, %27, %cst_24 {dimension_numbers = #tpu.dot_dimension_numbers<[1], [0], [0], [1], [0, 0, 1, 1], [], []>} : vector<8x128xbf16>, vector<128x512xbf16>, vector<8x512xf32> -> vector<8x512xf32>
      %29 = arith.truncf %arg13 : vector<8x128xf32> to vector<8x128xbf16>
      %c0_25 = arith.constant 0 : index
      %c0_26 = arith.constant 0 : index
      %30 = vector.load %arg6[%c0_25, %c0_26] : memref<128x512xbf16, #tpu.memory_space<vmem>>, vector<128x512xbf16>
      %cst_27 = arith.constant dense<0.000000e+00> : vector<8x512xf32>
      %31 = tpu.matmul %29, %30, %cst_27 {dimension_numbers = #tpu.dot_dimension_numbers<[1], [0], [0], [1], [0, 0, 1, 1], [], []>} : vector<8x128xbf16>, vector<128x512xbf16>, vector<8x512xf32> -> vector<8x512xf32>
      %32 = arith.addf %28, %31 : vector<8x512xf32>
      %33 = vector.extract_strided_slice %32 {offsets = [0, 0], sizes = [8, 128], strides = [1, 1]} : vector<8x512xf32> to vector<8x128xf32>
      %34 = arith.negf %33 : vector<8x128xf32>
      %35 = math.exp %34 : vector<8x128xf32>
      %cst_28 = arith.constant 1.000000e+00 : f32
      %36 = vector.broadcast %cst_28 : f32 to vector<8x128xf32>
      %37 = arith.addf %36, %35 : vector<8x128xf32>
      %38 = arith.divf %36, %37 : vector<8x128xf32>
      %39 = vector.extract_strided_slice %32 {offsets = [0, 128], sizes = [8, 128], strides = [1, 1]} : vector<8x512xf32> to vector<8x128xf32>
      %40 = arith.negf %39 : vector<8x128xf32>
      %41 = math.exp %40 : vector<8x128xf32>
      %cst_29 = arith.constant 1.000000e+00 : f32
      %42 = vector.broadcast %cst_29 : f32 to vector<8x128xf32>
      %43 = arith.addf %42, %41 : vector<8x128xf32>
      %44 = arith.divf %42, %43 : vector<8x128xf32>
      %45 = vector.extract_strided_slice %32 {offsets = [0, 256], sizes = [8, 128], strides = [1, 1]} : vector<8x512xf32> to vector<8x128xf32>
      %46 = math.tanh %45 : vector<8x128xf32>
      %47 = vector.extract_strided_slice %32 {offsets = [0, 384], sizes = [8, 128], strides = [1, 1]} : vector<8x512xf32> to vector<8x128xf32>
      %48 = arith.negf %47 : vector<8x128xf32>
      %49 = math.exp %48 : vector<8x128xf32>
      %cst_30 = arith.constant 1.000000e+00 : f32
      %50 = vector.broadcast %cst_30 : f32 to vector<8x128xf32>
      %51 = arith.addf %50, %49 : vector<8x128xf32>
      %52 = arith.divf %50, %51 : vector<8x128xf32>
      %53 = arith.mulf %44, %arg14 : vector<8x128xf32>
      %54 = arith.mulf %38, %46 : vector<8x128xf32>
      %55 = arith.addf %53, %54 : vector<8x128xf32>
      %56 = math.tanh %55 : vector<8x128xf32>
      %57 = arith.mulf %52, %56 : vector<8x128xf32>
      %58 = arith.truncf %57 : vector<8x128xf32> to vector<8x128xbf16>
      %c0_31 = arith.constant 0 : index
      %c0_32 = arith.constant 0 : index
      %59 = vector.load %arg8[%c0_31, %c0_32] : memref<128x128xbf16, #tpu.memory_space<vmem>>, vector<128x128xbf16>
      %cst_33 = arith.constant dense<0.000000e+00> : vector<8x128xf32>
      %60 = tpu.matmul %58, %59, %cst_33 {dimension_numbers = #tpu.dot_dimension_numbers<[1], [0], [0], [1], [0, 0, 1, 1], [], []>} : vector<8x128xbf16>, vector<128x128xbf16>, vector<8x128xf32> -> vector<8x128xf32>
      %61 = arith.addf %60, %11 : vector<8x128xf32>
      %62 = arith.index_cast %arg12 : i32 to index
      %c0_34 = arith.constant 0 : index
      %c0_35 = arith.constant 0 : index
      %63 = vector.load %arg10[%62, %c0_34, %c0_35] : memref<8x8x128xf32, #tpu.memory_space<vmem>>, vector<1x8x128xf32>
      %64 = vector.shape_cast %63 : vector<1x8x128xf32> to vector<8x128xf32>
      %65 = vector.shape_cast %61 : vector<8x128xf32> to vector<1x8x128xf32>
      tpu.vector_store %arg10[%62, %c0_34, %c0_35], %65 {strides = array<i32>} : memref<8x8x128xf32, #tpu.memory_space<vmem>>, vector<1x8x128xf32>,
      %cst_36 = arith.constant dense<0xFF800000> : vector<8xf32>
      %66 = vector.multi_reduction <maximumf>, %61, %cst_36 [1] : vector<8x128xf32> to vector<8xf32>
      %67 = vector.shape_cast %66 : vector<8xf32> to vector<8x1xf32>
      %68 = vector.broadcast %67 : vector<8x1xf32> to vector<8x128xf32>
      %69 = arith.cmpf oeq, %61, %68 : vector<8x128xf32>
      %c128_i32 = arith.constant 128 : i32
      %70 = vector.broadcast %c128_i32 : i32 to vector<8x128xi32>
      %71 = arith.select %69, %8, %70 : vector<8x128xi1>, vector<8x128xi32>
      %cst_37 = arith.constant dense<2147483647> : vector<8xi32>
      %72 = vector.multi_reduction <minsi>, %71, %cst_37 [1] : vector<8x128xi32> to vector<8xi32>
      %73 = vector.shape_cast %72 : vector<8xi32> to vector<8x1xi32>
      %74 = vector.broadcast %73 : vector<8x1xi32> to vector<8x128xi32>
      %75 = arith.cmpi eq, %8, %74 : vector<8x128xi32>
      %76 = arith.extui %75 : vector<8x128xi1> to vector<8x128xi32>
      %77 = arith.sitofp %76 : vector<8x128xi32> to vector<8x128xf32>
      %78 = arith.index_cast %arg12 : i32 to index
      %c0_38 = arith.constant 0 : index
      %c0_39 = arith.constant 0 : index
      %79 = vector.load %arg1[%78, %c0_38, %c0_39] : memref<8x8x1xi32, #tpu.memory_space<vmem>>, vector<1x8x1xi32>
      %80 = vector.shape_cast %79 : vector<1x8x1xi32> to vector<8x1xi32>
      %81 = vector.broadcast %80 : vector<8x1xi32> to vector<8x128xi32>
      %82 = arith.cmpi eq, %8, %81 : vector<8x128xi32>
      %83 = arith.extui %82 : vector<8x128xi1> to vector<8x128xi32>
      %84 = arith.sitofp %83 : vector<8x128xi32> to vector<8x128xf32>
      %85 = arith.index_cast %arg12 : i32 to index
      %86 = memref.load %arg0[%85] : memref<8xf32, #tpu.memory_space<smem>>
      %87 = vector.broadcast %86 : f32 to vector<8x128xf32>
      %88 = arith.mulf %87, %84 : vector<8x128xf32>
      %cst_40 = arith.constant 1.000000e+00 : f32
      %89 = arith.subf %cst_40, %86 : f32
      %90 = vector.broadcast %89 : f32 to vector<8x128xf32>
      %91 = arith.mulf %90, %77 : vector<8x128xf32>
      %92 = arith.addf %88, %91 : vector<8x128xf32>
      %93 = arith.truncf %92 : vector<8x128xf32> to vector<8x128xbf16>
      scf.yield %57, %55, %93 : vector<8x128xf32>, vector<8x128xf32>, vector<8x128xbf16>
    }
    %c7_i32_21 = arith.constant 7 : i32
    return
  }
}

</mosaic_0001>

<llo_original>
// kernel: seq2seq_forward.2
$region0: #{seq2seq_forward.2}
  #allocation0 [shape = 'u32[]', space=smem, size = 0x4, offset = 0x4, fixed_abs, tag = 'smem constant byte address 0x4 - core index']
  #allocation1 [shape = 'u32[144,128]{1,0:T(1,128)}', space=vmem, size = 0x12000, scoped, tag = 'internal scratch']
  #allocation2 [shape = 'f32[64,512]{1,0:T(8,128)}', space=vmem, size = 0x20000, scoped, tag = 'scratch operand']
  %s0 = inlined_call_operand.vmem [shape: bf16[64,128], index: 0, kind: input, shape index: {}]
  %s1 = inlined_call_operand.vmem [shape: bf16[128,512], index: 1, kind: input, shape index: {}]
  %s2 = inlined_call_operand.hbm [shape: bf16[128,512], index: 2, kind: input, shape index: {}]
  %s3 = inlined_call_operand.vmem [shape: f32[1,512], index: 3, kind: input, shape index: {}]
  %s4 = inlined_call_operand.vmem [shape: f32[8,128], index: 4, kind: output, shape index: {0}]
  %s5 = inlined_call_operand.vmem [shape: f32[8,128], index: 5, kind: output, shape index: {1}]
  %6 = xla_tuple %s4, %s5
  %s7 = sld [smem:[#allocation0]]
  $region45: #{seq2seq_forward.2} parent=0
    _
  %s9 = ssub.s32 1, %s7
  %s10 = scalar_select 0, %s9, %s7
  $region1: #{seq2seq_forward.2} parent=0
    #allocation3 [shape = 'u8[131072]{0}', space=vmem, size = 0x20000, scoped, tag = 'input window, operand 2, single buffered']
    #allocation4 [shape = 's32[1]{0}', space=sflag, size = 0x4, scoped, tag = 'scoped memory for seq2seq_forward.2']
    %11 = vsyncpa [#allocation4], 0
    // Predicated region
    $region2: #{seq2seq_forward.2} parent=1 // pred_check
      _
    $region3: #{seq2seq_forward.2} parent=1 // pred_check_branch
      %13 = sbr.rel (0) target = $region5
    $region4: #{seq2seq_forward.2} parent=1 // pred_region
      _
    $region5: #{seq2seq_forward.2} parent=1 // pred_fallthru
      _
    // Predicated region
    $region6: #{seq2seq_forward.2} parent=1 // pred_check
      _
    $region7: #{seq2seq_forward.2} parent=1 // pred_check_branch
      %15 = sbr.rel (0) target = $region9
    $region8: #{seq2seq_forward.2} parent=1 // pred_region
      _
    $region9: #{seq2seq_forward.2} parent=1 // pred_fallthru
      _
    // Predicated region
    $region10: #{seq2seq_forward.2} parent=1 // pred_check
      _
    $region11: #{seq2seq_forward.2} parent=1 // pred_check_branch
      %17 = sbr.rel (0) target = $region13
    $region12: #{seq2seq_forward.2} parent=1 // pred_region
      %s19 = ssub.s32 4096, 4096
      %20 = vsyncadd [#allocation4], %s19
      %s21 = sshll.u32 [#allocation3], 4
      %s22 = int_to_ptr.vmem [resolvable:$true] %s21
      %27 = dma.hbm_to_vmem [thread:$0]  %s2, 4096, %s22, [#allocation4], 256, 256, 16
    $region13: #{seq2seq_forward.2} parent=1 // pred_fallthru
      _
    // Predicated region
    $region14: #{seq2seq_forward.2} parent=1 // pred_check
      _
    $region15: #{seq2seq_forward.2} parent=1 // pred_check_branch
      %29 = sbr.rel (0) target = $region17
    $region16: #{seq2seq_forward.2} parent=1 // pred_region
      _
    $region17: #{seq2seq_forward.2} parent=1 // pred_fallthru
      _
    // Predicated region
    $region18: #{seq2seq_forward.2} parent=1 // pred_check
      _
    $region19: #{seq2seq_forward.2} parent=1 // pred_check_branch
      %31 = sbr.rel (0) target = $region21
    $region20: #{seq2seq_forward.2} parent=1 // pred_region
      %32 = dma.done [#allocation4], 4096
    $region21: #{seq2seq_forward.2} parent=1 // pred_fallthru
      _
    %v34 = vld [vmem:[%s0] sm:$0xf]
    %v35 = vld [vmem:[%s0 + $0x4] sm:$0xf]
    %v36 = vld [vmem:[%s0 + $0x8] sm:$0xf]
    %v37 = vld [vmem:[%s0 + $0xc] sm:$0xf]
    %v38 = vld [vmem:[%s0 + $0x10] sm:$0xf]
    %v39 = vld [vmem:[%s0 + $0x14] sm:$0xf]
    %v40 = vld [vmem:[%s0 + $0x18] sm:$0xf]
    %v41 = vld [vmem:[%s0 + $0x1c] sm:$0xf]
    %v42 = vld [vmem:[%s1] sm:$0xff]
    %v43 = vld [vmem:[%s1 + $0x8] sm:$0xff]
    %v44 = vld [vmem:[%s1 + $0x10] sm:$0xff]
    %v45 = vld [vmem:[%s1 + $0x18] sm:$0xff]
    %v46 = vld [vmem:[%s1 + $0x20] sm:$0xff]
    %v47 = vld [vmem:[%s1 + $0x28] sm:$0xff]
    %v48 = vld [vmem:[%s1 + $0x30] sm:$0xff]
    %v49 = vld [vmem:[%s1 + $0x38] sm:$0xff]
    %v50 = vld [vmem:[%s1 + $0x40] sm:$0xff]
    %v51 = vld [vmem:[%s1 + $0x48] sm:$0xff]
    %v52 = vld [vmem:[%s1 + $0x50] sm:$0xff]
    %v53 = vld [vmem:[%s1 + $0x58] sm:$0xff]
    %v54 = vld [vmem:[%s1 + $0x60] sm:$0xff]
    %v55 = vld [vmem:[%s1 + $0x68] sm:$0xff]
    %v56 = vld [vmem:[%s1 + $0x70] sm:$0xff]
    %v57 = vld [vmem:[%s1 + $0x78] sm:$0xff]
    %v58 = vld [vmem:[%s1 + $0x80] sm:$0xff]
    %v59 = vld [vmem:[%s1 + $0x88] sm:$0xff]
    %v60 = vld [vmem:[%s1 + $0x90] sm:$0xff]
    %v61 = vld [vmem:[%s1 + $0x98] sm:$0xff]
    %v62 = vld [vmem:[%s1 + $0xa0] sm:$0xff]
    %v63 = vld [vmem:[%s1 + $0xa8] sm:$0xff]
    %v64 = vld [vmem:[%s1 + $0xb0] sm:$0xff]
    %v65 = vld [vmem:[%s1 + $0xb8] sm:$0xff]
    %v66 = vld [vmem:[%s1 + $0xc0] sm:$0xff]
    %v67 = vld [vmem:[%s1 + $0xc8] sm:$0xff]
    %v68 = vld [vmem:[%s1 + $0xd0] sm:$0xff]
    %v69 = vld [vmem:[%s1 + $0xd8] sm:$0xff]
    %v70 = vld [vmem:[%s1 + $0xe0] sm:$0xff]
    %v71 = vld [vmem:[%s1 + $0xe8] sm:$0xff]
    %v72 = vld [vmem:[%s1 + $0xf0] sm:$0xff]
    %v73 = vld [vmem:[%s1 + $0xf8] sm:$0xff]
    %v74 = vld [vmem:[%s3] sm:$0xf]
    %v76 = vlaneseq
    %v77 = vshrl.u32 %v76, 7
    %v78 = vsub.s32 0, %v77
    %v79 = vrot.slane %v74, %v78
    %v80 = vlaneseq
    %v81 = vshrl.u32 %v80, 7
    %v82 = vsub.s32 1, %v81
    %v83 = vrot.slane %v74, %v82
    %v84 = vlaneseq
    %v85 = vshrl.u32 %v84, 7
    %v86 = vsub.s32 2, %v85
    %v87 = vrot.slane %v74, %v86
    %v88 = vlaneseq
    %v89 = vshrl.u32 %v88, 7
    %v90 = vsub.s32 3, %v89
    %v91 = vrot.slane %v74, %v90
    %v104 = vunpack.c.l.b16 %v34
    %v105 = vunpack.c.l.b16 %v35
    %v106 = vunpack.c.l.b16 %v36
    %v107 = vunpack.c.l.b16 %v37
    %v108 = vunpack.c.l.b16 %v38
    %v109 = vunpack.c.l.b16 %v39
    %v110 = vunpack.c.l.b16 %v40
    %v111 = vunpack.c.l.b16 %v41
    %v112 = vpack.c.b16 %v105, %v104
    %v113 = vpack.c.b16 %v107, %v106
    %v114 = vpack.c.b16 %v109, %v108
    %v115 = vpack.c.b16 %v111, %v110
    %v152 = vunpack.c.l.b16 %v42
    %v153 = vunpack.c.h.b16 %v42
    %v154 = vunpack.c.l.b16 %v43
    %v155 = vunpack.c.h.b16 %v43
    %v156 = vunpack.c.l.b16 %v44
    %v157 = vunpack.c.h.b16 %v44
    %v158 = vunpack.c.l.b16 %v45
    %v159 = vunpack.c.h.b16 %v45
    %v160 = vunpack.c.l.b16 %v46
    %v161 = vunpack.c.h.b16 %v46
    %v162 = vunpack.c.l.b16 %v47
    %v163 = vunpack.c.h.b16 %v47
    %v164 = vunpack.c.l.b16 %v48
    %v165 = vunpack.c.h.b16 %v48
    %v166 = vunpack.c.l.b16 %v49
    %v167 = vunpack.c.h.b16 %v49
    %v168 = vunpack.c.l.b16 %v50
    %v169 = vunpack.c.h.b16 %v50
    %v170 = vunpack.c.l.b16 %v51
    %v171 = vunpack.c.h.b16 %v51
    %v172 = vunpack.c.l.b16 %v52
    %v173 = vunpack.c.h.b16 %v52
    %v174 = vunpack.c.l.b16 %v53
    %v175 = vunpack.c.h.b16 %v53
    %v176 = vunpack.c.l.b16 %v54
    %v177 = vunpack.c.h.b16 %v54
    %v178 = vunpack.c.l.b16 %v55
    %v179 = vunpack.c.h.b16 %v55
    %v180 = vunpack.c.l.b16 %v56
    %v181 = vunpack.c.h.b16 %v56
    %v182 = vunpack.c.l.b16 %v57
    %v183 = vunpack.c.h.b16 %v57
    %v184 = vunpack.c.l.b16 %v58
    %v185 = vunpack.c.h.b16 %v58
    %v186 = vunpack.c.l.b16 %v59
    %v187 = vunpack.c.h.b16 %v59
    %v188 = vunpack.c.l.b16 %v60
    %v189 = vunpack.c.h.b16 %v60
    %v190 = vunpack.c.l.b16 %v61
    %v191 = vunpack.c.h.b16 %v61
    %v192 = vunpack.c.l.b16 %v62
    %v193 = vunpack.c.h.b16 %v62
    %v194 = vunpack.c.l.b16 %v63
    %v195 = vunpack.c.h.b16 %v63
    %v196 = vunpack.c.l.b16 %v64
    %v197 = vunpack.c.h.b16 %v64
    %v198 = vunpack.c.l.b16 %v65
    %v199 = vunpack.c.h.b16 %v65
    %v200 = vunpack.c.l.b16 %v66
    %v201 = vunpack.c.h.b16 %v66
    %v202 = vunpack.c.l.b16 %v67
    %v203 = vunpack.c.h.b16 %v67
    %v204 = vunpack.c.l.b16 %v68
    %v205 = vunpack.c.h.b16 %v68
    %v206 = vunpack.c.l.b16 %v69
    %v207 = vunpack.c.h.b16 %v69
    %v208 = vunpack.c.l.b16 %v70
    %v209 = vunpack.c.h.b16 %v70
    %v210 = vunpack.c.l.b16 %v71
    %v211 = vunpack.c.h.b16 %v71
    %v212 = vunpack.c.l.b16 %v72
    %v213 = vunpack.c.h.b16 %v72
    %v214 = vunpack.c.l.b16 %v73
    %v215 = vunpack.c.h.b16 %v73
    %v216 = vpack.c.b16 %v156, %v152
    %v217 = vpack.c.b16 %v157, %v153
    %v218 = vpack.c.b16 %v158, %v154
    %v219 = vpack.c.b16 %v159, %v155
    %v220 = vpack.c.b16 %v164, %v160
    %v221 = vpack.c.b16 %v165, %v161
    %v222 = vpack.c.b16 %v166, %v162
    %v223 = vpack.c.b16 %v167, %v163
    %v224 = vpack.c.b16 %v172, %v168
    %v225 = vpack.c.b16 %v173, %v169
    %v226 = vpack.c.b16 %v174, %v170
    %v227 = vpack.c.b16 %v175, %v171
    %v228 = vpack.c.b16 %v180, %v176
    %v229 = vpack.c.b16 %v181, %v177
    %v230 = vpack.c.b16 %v182, %v178
    %v231 = vpack.c.b16 %v183, %v179
    %v232 = vpack.c.b16 %v188, %v184
    %v233 = vpack.c.b16 %v189, %v185
    %v234 = vpack.c.b16 %v190, %v186
    %v235 = vpack.c.b16 %v191, %v187
    %v236 = vpack.c.b16 %v196, %v192
    %v237 = vpack.c.b16 %v197, %v193
    %v238 = vpack.c.b16 %v198, %v194
    %v239 = vpack.c.b16 %v199, %v195
    %v240 = vpack.c.b16 %v204, %v200
    %v241 = vpack.c.b16 %v205, %v201
    %v242 = vpack.c.b16 %v206, %v202
    %v243 = vpack.c.b16 %v207, %v203
    %v244 = vpack.c.b16 %v212, %v208
    %v245 = vpack.c.b16 %v213, %v209
    %v246 = vpack.c.b16 %v214, %v210
    %v247 = vpack.c.b16 %v215, %v211
    %280 = vmatprep.subr.bf16.mxu0 %v217
    %281 = vmatpush1.bf16.msra.mxu0 %v216
    %282 = vmatprep.subr.bf16.mxu0 %v221
    %283 = vmatpush1.bf16.msra.mxu0 %v220
    %284 = vmatprep.subr.bf16.mxu0 %v225
    %285 = vmatpush1.bf16.msra.mxu0 %v224
    %286 = vmatprep.subr.bf16.mxu0 %v229
    %287 = vmatpush1.bf16.msra.mxu0 %v228
    %288 = vmatprep.subr.bf16.mxu0 %v233
    %289 = vmatpush1.bf16.msra.mxu0 %v232
    %290 = vmatprep.subr.bf16.mxu0 %v237
    %291 = vmatpush1.bf16.msra.mxu0 %v236
    %292 = vmatprep.subr.bf16.mxu0 %v241
    %293 = vmatpush1.bf16.msra.mxu0 %v240
    %294 = vmatprep.subr.bf16.mxu0 %v245
    %295 = vmatpush1.bf16.msra.mxu0 %v244
    %296 = vmatprep.subr.bf16.mxu0 0
    %297 = vmatpush1.bf16.msra.mxu0 0
    %298 = vmatprep.subr.bf16.mxu0 0
    %299 = vmatpush1.bf16.msra.mxu0 0
    %300 = vmatprep.subr.bf16.mxu0 0
    %301 = vmatpush1.bf16.msra.mxu0 0
    %302 = vmatprep.subr.bf16.mxu0 0
    %303 = vmatpush1.bf16.msra.mxu0 0
    %304 = vmatprep.subr.bf16.mxu0 0
    %305 = vmatpush1.bf16.msra.mxu0 0
    %306 = vmatprep.subr.bf16.mxu0 0
    %307 = vmatpush1.bf16.msra.mxu0 0
    %308 = vmatprep.subr.bf16.mxu0 0
    %309 = vmatpush1.bf16.msra.mxu0 0
    %310 = vmatprep.subr.bf16.mxu0 0
    %311 = vmatpush1.bf16.msra.mxu0 0
    %312 = vmatprep.mubr.bf16.mxu0 0
    %313 = vmatmul.mubr.bf16.gmra.mrb[0].mxu0 %v112
    %v314 = vpop.f32.mrb[0].mxu0
    %v315 = vadd.f32 %v79, %v314
    %v316 = vpop.f32.mrb[0].mxu0
    %v317 = vadd.f32 %v83, %v316
    %v318 = vpop.f32.mrb[0].mxu0
    %v319 = vadd.f32 %v79, %v318
    %v320 = vpop.f32.mrb[0].mxu0
    %v321 = vadd.f32 %v83, %v320
    %322 = vmatprep.mubr.bf16.mxu0 0
    %323 = vmatmul.mubr.bf16.gmra.mrb[0].mxu0 %v113
    %v324 = vpop.f32.mrb[0].mxu0
    %v325 = vadd.f32 %v79, %v324
    %v326 = vpop.f32.mrb[0].mxu0
    %v327 = vadd.f32 %v83, %v326
    %v328 = vpop.f32.mrb[0].mxu0
    %v329 = vadd.f32 %v79, %v328
    %v330 = vpop.f32.mrb[0].mxu0
    %v331 = vadd.f32 %v83, %v330
    %332 = vmatprep.mubr.bf16.mxu0 0
    %333 = vmatmul.mubr.bf16.gmra.mrb[0].mxu0 %v114
    %v334 = vpop.f32.mrb[0].mxu0
    %v335 = vadd.f32 %v79, %v334
    %v336 = vpop.f32.mrb[0].mxu0
    %v337 = vadd.f32 %v83, %v336
    %v338 = vpop.f32.mrb[0].mxu0
    %v339 = vadd.f32 %v79, %v338
    %v340 = vpop.f32.mrb[0].mxu0
    %v341 = vadd.f32 %v83, %v340
    %342 = vmatprep.mubr.bf16.mxu0 0
    %343 = vmatmul.mubr.bf16.gmra.mrb[0].mxu0 %v115
    %v344 = vpop.f32.mrb[0].mxu0
    %v345 = vadd.f32 %v79, %v344
    %v346 = vpop.f32.mrb[0].mxu0
    %v347 = vadd.f32 %v83, %v346
    %v348 = vpop.f32.mrb[0].mxu0
    %v349 = vadd.f32 %v79, %v348
    %v350 = vpop.f32.mrb[0].mxu0
    %v351 = vadd.f32 %v83, %v350
    %352 = vdwg.mxu0
    %353 = vmatprep.subr.bf16.mxu0 %v219
    %354 = vmatpush1.bf16.msra.mxu0 %v218
    %355 = vmatprep.subr.bf16.mxu0 %v223
    %356 = vmatpush1.bf16.msra.mxu0 %v222
    %357 = vmatprep.subr.bf16.mxu0 %v227
    %358 = vmatpush1.bf16.msra.mxu0 %v226
    %359 = vmatprep.subr.bf16.mxu0 %v231
    %360 = vmatpush1.bf16.msra.mxu0 %v230
    %361 = vmatprep.subr.bf16.mxu0 %v235
    %362 = vmatpush1.bf16.msra.mxu0 %v234
    %363 = vmatprep.subr.bf16.mxu0 %v239
    %364 = vmatpush1.bf16.msra.mxu0 %v238
    %365 = vmatprep.subr.bf16.mxu0 %v243
    %366 = vmatpush1.bf16.msra.mxu0 %v242
    %367 = vmatprep.subr.bf16.mxu0 %v247
    %368 = vmatpush1.bf16.msra.mxu0 %v246
    %369 = vmatprep.subr.bf16.mxu0 0
    %370 = vmatpush1.bf16.msra.mxu0 0
    %371 = vmatprep.subr.bf16.mxu0 0
    %372 = vmatpush1.bf16.msra.mxu0 0
    %373 = vmatprep.subr.bf16.mxu0 0
    %374 = vmatpush1.bf16.msra.mxu0 0
    %375 = vmatprep.subr.bf16.mxu0 0
    %376 = vmatpush1.bf16.msra.mxu0 0
    %377 = vmatprep.subr.bf16.mxu0 0
    %378 = vmatpush1.bf16.msra.mxu0 0
    %379 = vmatprep.subr.bf16.mxu0 0
    %380 = vmatpush1.bf16.msra.mxu0 0
    %381 = vmatprep.subr.bf16.mxu0 0
    %382 = vmatpush1.bf16.msra.mxu0 0
    %383 = vmatprep.subr.bf16.mxu0 0
    %384 = vmatpush1.bf16.msra.mxu0 0
    %385 = vmatprep.mubr.bf16.mxu0 0
    %386 = vmatmul.mubr.bf16.gmra.mrb[0].mxu0 %v112
    %v387 = vpop.f32.mrb[0].mxu0
    %v388 = vadd.f32 %v87, %v387
    %v389 = vpop.f32.mrb[0].mxu0
    %v390 = vadd.f32 %v91, %v389
    %v391 = vpop.f32.mrb[0].mxu0
    %v392 = vadd.f32 %v87, %v391
    %v393 = vpop.f32.mrb[0].mxu0
    %v394 = vadd.f32 %v91, %v393
    %395 = vmatprep.mubr.bf16.mxu0 0
    %396 = vmatmul.mubr.bf16.gmra.mrb[0].mxu0 %v113
    %v397 = vpop.f32.mrb[0].mxu0
    %v398 = vadd.f32 %v87, %v397
    %v399 = vpop.f32.mrb[0].mxu0
    %v400 = vadd.f32 %v91, %v399
    %v401 = vpop.f32.mrb[0].mxu0
    %v402 = vadd.f32 %v87, %v401
    %v403 = vpop.f32.mrb[0].mxu0
    %v404 = vadd.f32 %v91, %v403
    %405 = vmatprep.mubr.bf16.mxu0 0
    %406 = vmatmul.mubr.bf16.gmra.mrb[0].mxu0 %v114
    %v407 = vpop.f32.mrb[0].mxu0
    %v408 = vadd.f32 %v87, %v407
    %v409 = vpop.f32.mrb[0].mxu0
    %v410 = vadd.f32 %v91, %v409
    %v411 = vpop.f32.mrb[0].mxu0
    %v412 = vadd.f32 %v87, %v411
    %v413 = vpop.f32.mrb[0].mxu0
    %v414 = vadd.f32 %v91, %v413
    %415 = vmatprep.mubr.bf16.mxu0 0
    %416 = vmatmul.mubr.bf16.gmra.mrb[0].mxu0 %v115
    %v417 = vpop.f32.mrb[0].mxu0
    %v418 = vadd.f32 %v87, %v417
    %v419 = vpop.f32.mrb[0].mxu0
    %v420 = vadd.f32 %v91, %v419
    %v421 = vpop.f32.mrb[0].mxu0
    %v422 = vadd.f32 %v87, %v421
    %v423 = vpop.f32.mrb[0].mxu0
    %v424 = vadd.f32 %v91, %v423
    %425 = vdwg.mxu0
    %426 = vst [vmem:[#allocation2] sm:$0xff] %v315
    %427 = vst [vmem:[#allocation2 + $0x8] sm:$0xff] %v317
    %428 = vst [vmem:[#allocation2 + $0x10] sm:$0xff] %v388
    %429 = vst [vmem:[#allocation2 + $0x18] sm:$0xff] %v390
    %430 = vst [vmem:[#allocation2 + $0x20] sm:$0xff] %v319
    %431 = vst [vmem:[#allocation2 + $0x28] sm:$0xff] %v321
    %432 = vst [vmem:[#allocation2 + $0x30] sm:$0xff] %v392
    %433 = vst [vmem:[#allocation2 + $0x38] sm:$0xff] %v394
    %434 = vst [vmem:[#allocation2 + $0x40] sm:$0xff] %v325
    %435 = vst [vmem:[#allocation2 + $0x48] sm:$0xff] %v327
    %436 = vst [vmem:[#allocation2 + $0x50] sm:$0xff] %v398
    %437 = vst [vmem:[#allocation2 + $0x58] sm:$0xff] %v400
    %438 = vst [vmem:[#allocation2 + $0x60] sm:$0xff] %v329
    %439 = vst [vmem:[#allocation2 + $0x68] sm:$0xff] %v331
    %440 = vst [vmem:[#allocation2 + $0x70] sm:$0xff] %v402
    %441 = vst [vmem:[#allocation2 + $0x78] sm:$0xff] %v404
    %442 = vst [vmem:[#allocation2 + $0x80] sm:$0xff] %v335
    %443 = vst [vmem:[#allocation2 + $0x88] sm:$0xff] %v337
    %444 = vst [vmem:[#allocation2 + $0x90] sm:$0xff] %v408
    %445 = vst [vmem:[#allocation2 + $0x98] sm:$0xff] %v410
    %446 = vst [vmem:[#allocation2 + $0xa0] sm:$0xff] %v339
    %447 = vst [vmem:[#allocation2 + $0xa8] sm:$0xff] %v341
    %448 = vst [vmem:[#allocation2 + $0xb0] sm:$0xff] %v412
    %449 = vst [vmem:[#allocation2 + $0xb8] sm:$0xff] %v414
    %450 = vst [vmem:[#allocation2 + $0xc0] sm:$0xff] %v345
    %451 = vst [vmem:[#allocation2 + $0xc8] sm:$0xff] %v347
    %452 = vst [vmem:[#allocation2 + $0xd0] sm:$0xff] %v418
    %453 = vst [vmem:[#allocation2 + $0xd8] sm:$0xff] %v420
    %454 = vst [vmem:[#allocation2 + $0xe0] sm:$0xff] %v349
    %455 = vst [vmem:[#allocation2 + $0xe8] sm:$0xff] %v351
    %456 = vst [vmem:[#allocation2 + $0xf0] sm:$0xff] %v422
    %457 = vst [vmem:[#allocation2 + $0xf8] sm:$0xff] %v424
    loop: start=0, step=1, limit=8
    $region22: #{seq2seq_forward.2} parent=1 // loop_pre_header
      _
    $region23: #{seq2seq_forward.2} parent=1 // loop_header
      %s459 = sphi 0, %s463
      %p460 = scmp.ge.s32.totalorder %s459, 8
      %v464 = vphi 0.0, %v778
      %v465 = vphi 0.0, %v776
    $region24: #{seq2seq_forward.2} parent=1 // loop_header_branch
      %462 = sbr.rel (%p460) target = $region28
    $region25: #{seq2seq_forward.2} parent=1 // loop_body
      %s466 = smul.u32 %s459, 8
      %s467 = sshra.s32 %s466, 3
      %s468 = sand.u32 %s466, 7
      %s469 = smul.u32 %s467, 4
      %s470 = smul.addr %s469, 8
      %s471 = scalar_lea.vmem [#allocation2], %s470
      %v472 = vld [vmem:[%s471] sm:$0xff]
      %v473 = vld [vmem:[%s471 + $0x8] sm:$0xff]
      %v474 = vld [vmem:[%s471 + $0x10] sm:$0xff]
      %v475 = vld [vmem:[%s471 + $0x18] sm:$0xff]
      %v476 = vpack.c.bf16 %v464, %v464
      %v477 = vld [vmem:[#allocation3] sm:$0xff]
      %v478 = vld [vmem:[#allocation3 + $0x8] sm:$0xff]
      %v479 = vld [vmem:[#allocation3 + $0x10] sm:$0xff]
      %v480 = vld [vmem:[#allocation3 + $0x18] sm:$0xff]
      %v481 = vld [vmem:[#allocation3 + $0x20] sm:$0xff]
      %v482 = vld [vmem:[#allocation3 + $0x28] sm:$0xff]
      %v483 = vld [vmem:[#allocation3 + $0x30] sm:$0xff]
      %v484 = vld [vmem:[#allocation3 + $0x38] sm:$0xff]
      %v485 = vld [vmem:[#allocation3 + $0x40] sm:$0xff]
      %v486 = vld [vmem:[#allocation3 + $0x48] sm:$0xff]
      %v487 = vld [vmem:[#allocation3 + $0x50] sm:$0xff]
      %v488 = vld [vmem:[#allocation3 + $0x58] sm:$0xff]
      %v489 = vld [vmem:[#allocation3 + $0x60] sm:$0xff]
      %v490 = vld [vmem:[#allocation3 + $0x68] sm:$0xff]
      %v491 = vld [vmem:[#allocation3 + $0x70] sm:$0xff]
      %v492 = vld [vmem:[#allocation3 + $0x78] sm:$0xff]
      %v493 = vld [vmem:[#allocation3 + $0x80] sm:$0xff]
      %v494 = vld [vmem:[#allocation3 + $0x88] sm:$0xff]
      %v495 = vld [vmem:[#allocation3 + $0x90] sm:$0xff]
      %v496 = vld [vmem:[#allocation3 + $0x98] sm:$0xff]
      %v497 = vld [vmem:[#allocation3 + $0xa0] sm:$0xff]
      %v498 = vld [vmem:[#allocation3 + $0xa8] sm:$0xff]
      %v499 = vld [vmem:[#allocation3 + $0xb0] sm:$0xff]
      %v500 = vld [vmem:[#allocation3 + $0xb8] sm:$0xff]
      %v501 = vld [vmem:[#allocation3 + $0xc0] sm:$0xff]
      %v502 = vld [vmem:[#allocation3 + $0xc8] sm:$0xff]
      %v503 = vld [vmem:[#allocation3 + $0xd0] sm:$0xff]
      %v504 = vld [vmem:[#allocation3 + $0xd8] sm:$0xff]
      %v505 = vld [vmem:[#allocation3 + $0xe0] sm:$0xff]
      %v506 = vld [vmem:[#allocation3 + $0xe8] sm:$0xff]
      %v507 = vld [vmem:[#allocation3 + $0xf0] sm:$0xff]
      %v508 = vld [vmem:[#allocation3 + $0xf8] sm:$0xff]
      %v541 = vunpack.c.l.b16 %v477
      %v542 = vunpack.c.h.b16 %v477
      %v543 = vunpack.c.l.b16 %v478
      %v544 = vunpack.c.h.b16 %v478
      %v545 = vunpack.c.l.b16 %v479
      %v546 = vunpack.c.h.b16 %v479
      %v547 = vunpack.c.l.b16 %v480
      %v548 = vunpack.c.h.b16 %v480
      %v549 = vunpack.c.l.b16 %v481
      %v550 = vunpack.c.h.b16 %v481
      %v551 = vunpack.c.l.b16 %v482
      %v552 = vunpack.c.h.b16 %v482
      %v553 = vunpack.c.l.b16 %v483
      %v554 = vunpack.c.h.b16 %v483
      %v555 = vunpack.c.l.b16 %v484
      %v556 = vunpack.c.h.b16 %v484
      %v557 = vunpack.c.l.b16 %v485
      %v558 = vunpack.c.h.b16 %v485
      %v559 = vunpack.c.l.b16 %v486
      %v560 = vunpack.c.h.b16 %v486
      %v561 = vunpack.c.l.b16 %v487
      %v562 = vunpack.c.h.b16 %v487
      %v563 = vunpack.c.l.b16 %v488
      %v564 = vunpack.c.h.b16 %v488
      %v565 = vunpack.c.l.b16 %v489
      %v566 = vunpack.c.h.b16 %v489
      %v567 = vunpack.c.l.b16 %v490
      %v568 = vunpack.c.h.b16 %v490
      %v569 = vunpack.c.l.b16 %v491
      %v570 = vunpack.c.h.b16 %v491
      %v571 = vunpack.c.l.b16 %v492
      %v572 = vunpack.c.h.b16 %v492
      %v573 = vunpack.c.l.b16 %v493
      %v574 = vunpack.c.h.b16 %v493
      %v575 = vunpack.c.l.b16 %v494
      %v576 = vunpack.c.h.b16 %v494
      %v577 = vunpack.c.l.b16 %v495
      %v578 = vunpack.c.h.b16 %v495
      %v579 = vunpack.c.l.b16 %v496
      %v580 = vunpack.c.h.b16 %v496
      %v581 = vunpack.c.l.b16 %v497
      %v582 = vunpack.c.h.b16 %v497
      %v583 = vunpack.c.l.b16 %v498
      %v584 = vunpack.c.h.b16 %v498
      %v585 = vunpack.c.l.b16 %v499
      %v586 = vunpack.c.h.b16 %v499
      %v587 = vunpack.c.l.b16 %v500
      %v588 = vunpack.c.h.b16 %v500
      %v589 = vunpack.c.l.b16 %v501
      %v590 = vunpack.c.h.b16 %v501
      %v591 = vunpack.c.l.b16 %v502
      %v592 = vunpack.c.h.b16 %v502
      %v593 = vunpack.c.l.b16 %v503
      %v594 = vunpack.c.h.b16 %v503
      %v595 = vunpack.c.l.b16 %v504
      %v596 = vunpack.c.h.b16 %v504
      %v597 = vunpack.c.l.b16 %v505
      %v598 = vunpack.c.h.b16 %v505
      %v599 = vunpack.c.l.b16 %v506
      %v600 = vunpack.c.h.b16 %v506
      %v601 = vunpack.c.l.b16 %v507
      %v602 = vunpack.c.h.b16 %v507
      %v603 = vunpack.c.l.b16 %v508
      %v604 = vunpack.c.h.b16 %v508
      %v605 = vpack.c.b16 %v545, %v541
      %v606 = vpack.c.b16 %v546, %v542
      %v607 = vpack.c.b16 %v547, %v543
      %v608 = vpack.c.b16 %v548, %v544
      %v609 = vpack.c.b16 %v553, %v549
      %v610 = vpack.c.b16 %v554, %v550
      %v611 = vpack.c.b16 %v555, %v551
      %v612 = vpack.c.b16 %v556, %v552
      %v613 = vpack.c.b16 %v561, %v557
      %v614 = vpack.c.b16 %v562, %v558
      %v615 = vpack.c.b16 %v563, %v559
      %v616 = vpack.c.b16 %v564, %v560
      %v617 = vpack.c.b16 %v569, %v565
      %v618 = vpack.c.b16 %v570, %v566
      %v619 = vpack.c.b16 %v571, %v567
      %v620 = vpack.c.b16 %v572, %v568
      %v621 = vpack.c.b16 %v577, %v573
      %v622 = vpack.c.b16 %v578, %v574
      %v623 = vpack.c.b16 %v579, %v575
      %v624 = vpack.c.b16 %v580, %v576
      %v625 = vpack.c.b16 %v585, %v581
      %v626 = vpack.c.b16 %v586, %v582
      %v627 = vpack.c.b16 %v587, %v583
      %v628 = vpack.c.b16 %v588, %v584
      %v629 = vpack.c.b16 %v593, %v589
      %v630 = vpack.c.b16 %v594, %v590
      %v631 = vpack.c.b16 %v595, %v591
      %v632 = vpack.c.b16 %v596, %v592
      %v633 = vpack.c.b16 %v601, %v597
      %v634 = vpack.c.b16 %v602, %v598
      %v635 = vpack.c.b16 %v603, %v599
      %v636 = vpack.c.b16 %v604, %v600
      %669 = vmatprep.subr.bf16.mxu0 %v606
      %670 = vmatpush1.bf16.msra.mxu0 %v605
      %671 = vmatprep.subr.bf16.mxu0 %v610
      %672 = vmatpush1.bf16.msra.mxu0 %v609
      %673 = vmatprep.subr.bf16.mxu0 %v614
      %674 = vmatpush1.bf16.msra.mxu0 %v613
      %675 = vmatprep.subr.bf16.mxu0 %v618
      %676 = vmatpush1.bf16.msra.mxu0 %v617
      %677 = vmatprep.subr.bf16.mxu0 %v622
      %678 = vmatpush1.bf16.msra.mxu0 %v621
      %679 = vmatprep.subr.bf16.mxu0 %v626
      %680 = vmatpush1.bf16.msra.mxu0 %v625
      %681 = vmatprep.subr.bf16.mxu0 %v630
      %682 = vmatpush1.bf16.msra.mxu0 %v629
      %683 = vmatprep.subr.bf16.mxu0 %v634
      %684 = vmatpush1.bf16.msra.mxu0 %v633
      %685 = vmatprep.subr.bf16.mxu0 0
      %686 = vmatpush1.bf16.msra.mxu0 0
      %687 = vmatprep.subr.bf16.mxu0 0
      %688 = vmatpush1.bf16.msra.mxu0 0
      %689 = vmatprep.subr.bf16.mxu0 0
      %690 = vmatpush1.bf16.msra.mxu0 0
      %691 = vmatprep.subr.bf16.mxu0 0
      %692 = vmatpush1.bf16.msra.mxu0 0
      %693 = vmatprep.subr.bf16.mxu0 0
      %694 = vmatpush1.bf16.msra.mxu0 0
      %695 = vmatprep.subr.bf16.mxu0 0
      %696 = vmatpush1.bf16.msra.mxu0 0
      %697 = vmatprep.subr.bf16.mxu0 0
      %698 = vmatpush1.bf16.msra.mxu0 0
      %699 = vmatprep.subr.bf16.mxu0 0
      %700 = vmatpush1.bf16.msra.mxu0 0
      %701 = vmatprep.mubr.bf16.mxu0 0
      %702 = vmatmul.mubr.bf16.gmra.mrb[0].mxu0 %v476
      %v703 = vpop.f32.mrb[0].mxu0
      %v704 = vadd.f32 0.0, %v703
      %v705 = vpop.f32.mrb[0].mxu0
      %v706 = vadd.f32 0.0, %v705
      %v707 = vpop.f32.mrb[0].mxu0
      %v708 = vpop.f32.mrb[0].mxu0
      %709 = vdwg.mxu0
      %710 = vmatprep.subr.bf16.mxu0 %v608
      %711 = vmatpush1.bf16.msra.mxu0 %v607
      %712 = vmatprep.subr.bf16.mxu0 %v612
      %713 = vmatpush1.bf16.msra.mxu0 %v611
      %714 = vmatprep.subr.bf16.mxu0 %v616
      %715 = vmatpush1.bf16.msra.mxu0 %v615
      %716 = vmatprep.subr.bf16.mxu0 %v620
      %717 = vmatpush1.bf16.msra.mxu0 %v619
      %718 = vmatprep.subr.bf16.mxu0 %v624
      %719 = vmatpush1.bf16.msra.mxu0 %v623
      %720 = vmatprep.subr.bf16.mxu0 %v628
      %721 = vmatpush1.bf16.msra.mxu0 %v627
      %722 = vmatprep.subr.bf16.mxu0 %v632
      %723 = vmatpush1.bf16.msra.mxu0 %v631
      %724 = vmatprep.subr.bf16.mxu0 %v636
      %725 = vmatpush1.bf16.msra.mxu0 %v635
      %726 = vmatprep.subr.bf16.mxu0 0
      %727 = vmatpush1.bf16.msra.mxu0 0
      %728 = vmatprep.subr.bf16.mxu0 0
      %729 = vmatpush1.bf16.msra.mxu0 0
      %730 = vmatprep.subr.bf16.mxu0 0
      %731 = vmatpush1.bf16.msra.mxu0 0
      %732 = vmatprep.subr.bf16.mxu0 0
      %733 = vmatpush1.bf16.msra.mxu0 0
      %734 = vmatprep.subr.bf16.mxu0 0
      %735 = vmatpush1.bf16.msra.mxu0 0
      %736 = vmatprep.subr.bf16.mxu0 0
      %737 = vmatpush1.bf16.msra.mxu0 0
      %738 = vmatprep.subr.bf16.mxu0 0
      %739 = vmatpush1.bf16.msra.mxu0 0
      %740 = vmatprep.subr.bf16.mxu0 0
      %741 = vmatpush1.bf16.msra.mxu0 0
      %742 = vmatprep.mubr.bf16.mxu0 0
      %743 = vmatmul.mubr.bf16.gmra.mrb[0].mxu0 %v476
      %v744 = vpop.f32.mrb[0].mxu0
      %v745 = vadd.f32 0.0, %v744
      %v746 = vpop.f32.mrb[0].mxu0
      %v747 = vadd.f32 0.0, %v746
      %v748 = vpop.f32.mrb[0].mxu0
      %v749 = vpop.f32.mrb[0].mxu0
      %750 = vdwg.mxu0
      %v751 = vadd.f32 %v472, %v704
      %v752 = vadd.f32 %v473, %v706
      %v753 = vadd.f32 %v474, %v745
      %v754 = vadd.f32 %v475, %v747
      %v755 = vxor.u32 %v751, 2147483648
      %v756 = vmul.f32 %v755, 1.442695
      %v757 = vpow.pop %v756
      %v758 = vadd.f32 %v757, 1.0
      %v759 = vrcp.pop %v758
      %v760 = vmul.f32 1.0, %v759
      %v761 = vxor.u32 %v752, 2147483648
      %v762 = vmul.f32 %v761, 1.442695
      %v763 = vpow.pop %v762
      %v764 = vadd.f32 %v763, 1.0
      %v765 = vrcp.pop %v764
      %v766 = vmul.f32 1.0, %v765
      %v767 = vtanh.pop %v753
      %v768 = vxor.u32 %v754, 2147483648
      %v769 = vmul.f32 %v768, 1.442695
      %v770 = vpow.pop %v769
      %v771 = vadd.f32 %v770, 1.0
      %v772 = vrcp.pop %v771
      %v773 = vmul.f32 1.0, %v772
      %v774 = vmul.f32 %v766, %v465
      %v775 = vmul.f32 %v760, %v767
      %v776 = vadd.f32 %v774, %v775
      %v777 = vtanh.pop %v776
      %v778 = vmul.f32 %v773, %v777
    $region26: #{seq2seq_forward.2} parent=1 // loop_footer
      %s463 = sadd.s32 1, %s459
    $region27: #{seq2seq_forward.2} parent=1 // loop_footer_branch
      %458 = sbr.rel target = $region23
    $region28: #{seq2seq_forward.2} parent=1 // loop_exit
      _
    %779 = vst [vmem:[%s4] sm:$0xff] %v464
    %780 = vst [vmem:[%s5] sm:$0xff] %v465
    // Predicated region
    $region29: #{seq2seq_forward.2} parent=1 // pred_check
      _
    $region30: #{seq2seq_forward.2} parent=1 // pred_check_branch
      %782 = sbr.rel (0) target = $region32
    $region31: #{seq2seq_forward.2} parent=1 // pred_region
      _
    $region32: #{seq2seq_forward.2} parent=1 // pred_fallthru
      _
    // Predicated region
    $region33: #{seq2seq_forward.2} parent=1 // pred_check
      _
    $region34: #{seq2seq_forward.2} parent=1 // pred_check_branch
      %784 = sbr.rel (0) target = $region36
    $region35: #{seq2seq_forward.2} parent=1 // pred_region
      _
    $region36: #{seq2seq_forward.2} parent=1 // pred_fallthru
      _
    // Predicated region
    $region37: #{seq2seq_forward.2} parent=1 // pred_check
      _
    $region38: #{seq2seq_forward.2} parent=1 // pred_check_branch
      %786 = sbr.rel (0) target = $region40
    $region39: #{seq2seq_forward.2} parent=1 // pred_region
      _
    $region40: #{seq2seq_forward.2} parent=1 // pred_fallthru
      _
    // Predicated region
    $region41: #{seq2seq_forward.2} parent=1 // pred_check
      _
    $region42: #{seq2seq_forward.2} parent=1 // pred_check_branch
      %788 = sbr.rel (0) target = $region44
    $region43: #{seq2seq_forward.2} parent=1 // pred_region
      _
    $region44: #{seq2seq_forward.2} parent=1 // pred_fallthru
      _
    %789 = vsyncpa [#allocation4], 1

// kernel: seq2seq_forward.3
$region0: #{seq2seq_forward.3}
  #allocation0 [shape = 'u32[]', space=smem, size = 0x4, offset = 0x4, fixed_abs, tag = 'smem constant byte address 0x4 - core index']
  #allocation1 [shape = 'u32[144,128]{1,0:T(1,128)}', space=vmem, size = 0x12000, scoped, tag = 'internal scratch']
  #allocation2 [shape = 'bf16[128,512]{1,0:T(16,128)(2,1)}', space=vmem, size = 0x20000, scoped, tag = 'scratch operand']
  %s0 = inlined_call_operand.vmem [shape: f32[8], index: 0, kind: input, shape index: {}]
  %s1 = inlined_call_operand.vmem [shape: s32[8,8,1], index: 1, kind: input, shape index: {}]
  %s2 = inlined_call_operand.vmem [shape: f32[8,128], index: 2, kind: input, shape index: {}]
  %s3 = inlined_call_operand.vmem [shape: f32[8,128], index: 3, kind: input, shape index: {}]
  %s4 = inlined_call_operand.vmem [shape: bf16[128,128], index: 4, kind: input, shape index: {}]
  %s5 = inlined_call_operand.vmem [shape: bf16[128,512], index: 5, kind: input, shape index: {}]
  %s6 = inlined_call_operand.vmem [shape: bf16[128,512], index: 6, kind: input, shape index: {}]
  %s7 = inlined_call_operand.vmem [shape: f32[1,512], index: 7, kind: input, shape index: {}]
  %s8 = inlined_call_operand.vmem [shape: bf16[128,128], index: 8, kind: input, shape index: {}]
  %s9 = inlined_call_operand.vmem [shape: f32[1,128], index: 9, kind: input, shape index: {}]
  %s10 = inlined_call_operand.hbm [shape: f32[8,8,128], index: 10, kind: output, shape index: {}]
  %s11 = sld [smem:[#allocation0]]
  $region61: #{seq2seq_forward.3} parent=0
    _
  %s13 = ssub.s32 1, %s11
  %s14 = scalar_select 0, %s13, %s11
  $region1: #{seq2seq_forward.3} parent=0
    #allocation3 [shape = 'u8[512]{0}', space=smem, size = 0x200, scoped, tag = 'input window, operand 0, single buffered']
    #allocation4 [shape = 's32[1]{0}', space=sflag, size = 0x4, scoped, tag = 'scoped memory for seq2seq_forward.3']
    #allocation5 [shape = 's32[1]{0}', space=sflag, size = 0x4, scoped, tag = 'scoped memory for seq2seq_forward.3']
    #allocation6 [shape = 'u8[32768]{0}', space=vmem, size = 0x8000, scoped, tag = 'output window, operand 0, single buffered']
    %15 = vsyncpa [#allocation5], 0
    %16 = vsyncpa [#allocation4], 0
    // Predicated region
    $region2: #{seq2seq_forward.3} parent=1 // pred_check
      _
    $region3: #{seq2seq_forward.3} parent=1 // pred_check_branch
      %18 = sbr.rel (0) target = $region5
    $region4: #{seq2seq_forward.3} parent=1 // pred_region
      %s20 = ssub.s32 16, 16
      %21 = vsyncadd [#allocation5], %s20
      %s23 = sshll.u32 %s0, 4
      %s24 = int_to_ptr.vmem [resolvable:$true] %s23
      %26 = dma.vmem_to_smem %s24, 16, [#allocation3], [#allocation5]
    $region5: #{seq2seq_forward.3} parent=1 // pred_fallthru
      _
    // Predicated region
    $region6: #{seq2seq_forward.3} parent=1 // pred_check
      _
    $region7: #{seq2seq_forward.3} parent=1 // pred_check_branch
      %28 = sbr.rel (0) target = $region9
    $region8: #{seq2seq_forward.3} parent=1 // pred_region
      _
    $region9: #{seq2seq_forward.3} parent=1 // pred_fallthru
      _
    // Predicated region
    $region10: #{seq2seq_forward.3} parent=1 // pred_check
      _
    $region11: #{seq2seq_forward.3} parent=1 // pred_check_branch
      %30 = sbr.rel (0) target = $region13
    $region12: #{seq2seq_forward.3} parent=1 // pred_region
      _
    $region13: #{seq2seq_forward.3} parent=1 // pred_fallthru
      _
    // Predicated region
    $region14: #{seq2seq_forward.3} parent=1 // pred_check
      _
    $region15: #{seq2seq_forward.3} parent=1 // pred_check_branch
      %32 = sbr.rel (0) target = $region17
    $region16: #{seq2seq_forward.3} parent=1 // pred_region
      _
    $region17: #{seq2seq_forward.3} parent=1 // pred_fallthru
      _
    // Predicated region
    $region18: #{seq2seq_forward.3} parent=1 // pred_check
      _
    $region19: #{seq2seq_forward.3} parent=1 // pred_check_branch
      %34 = sbr.rel (0) target = $region21
    $region20: #{seq2seq_forward.3} parent=1 // pred_region
      _
    $region21: #{seq2seq_forward.3} parent=1 // pred_fallthru
      _
    // Predicated region
    $region22: #{seq2seq_forward.3} parent=1 // pred_check
      _
    $region23: #{seq2seq_forward.3} parent=1 // pred_check_branch
      %36 = sbr.rel (0) target = $region25
    $region24: #{seq2seq_forward.3} parent=1 // pred_region
      _
    $region25: #{seq2seq_forward.3} parent=1 // pred_fallthru
      _
    // Predicated region
    $region26: #{seq2seq_forward.3} parent=1 // pred_check
      _
    $region27: #{seq2seq_forward.3} parent=1 // pred_check_branch
      %38 = sbr.rel (0) target = $region29
    $region28: #{seq2seq_forward.3} parent=1 // pred_region
      _
    $region29: #{seq2seq_forward.3} parent=1 // pred_fallthru
      _
    // Predicated region
    $region30: #{seq2seq_forward.3} parent=1 // pred_check
      _
    $region31: #{seq2seq_forward.3} parent=1 // pred_check_branch
      %40 = sbr.rel (0) target = $region33
    $region32: #{seq2seq_forward.3} parent=1 // pred_region
      _
    $region33: #{seq2seq_forward.3} parent=1 // pred_fallthru
      _
    // Predicated region
    $region34: #{seq2seq_forward.3} parent=1 // pred_check
      _
    $region35: #{seq2seq_forward.3} parent=1 // pred_check_branch
      %42 = sbr.rel (0) target = $region37
    $region36: #{seq2seq_forward.3} parent=1 // pred_region
      _
    $region37: #{seq2seq_forward.3} parent=1 // pred_fallthru
      _
    // Predicated region
    $region38: #{seq2seq_forward.3} parent=1 // pred_check
      _
    $region39: #{seq2seq_forward.3} parent=1 // pred_check_branch
      %44 = sbr.rel (0) target = $region41
    $region40: #{seq2seq_forward.3} parent=1 // pred_region
      _
    $region41: #{seq2seq_forward.3} parent=1 // pred_fallthru
      _
    // Predicated region
    $region42: #{seq2seq_forward.3} parent=1 // pred_check
      _
    $region43: #{seq2seq_forward.3} parent=1 // pred_check_branch
      %46 = sbr.rel (0) target = $region45
    $region44: #{seq2seq_forward.3} parent=1 // pred_region
      %47 = dma.done [#allocation5], 16
    $region45: #{seq2seq_forward.3} parent=1 // pred_fallthru
      _
    %48 = sfence
    %v50 = vld [vmem:[%s4] sm:$0xf]
    %v51 = vld [vmem:[%s4 + $0x4] sm:$0xf]
    %v52 = vld [vmem:[%s4 + $0x8] sm:$0xf]
    %v53 = vld [vmem:[%s4 + $0xc] sm:$0xf]
    %v54 = vld [vmem:[%s4 + $0x10] sm:$0xf]
    %v55 = vld [vmem:[%s4 + $0x14] sm:$0xf]
    %v56 = vld [vmem:[%s4 + $0x18] sm:$0xf]
    %v57 = vld [vmem:[%s4 + $0x1c] sm:$0xf]
    %v58 = vld [vmem:[%s4 + $0x20] sm:$0xf]
    %v59 = vld [vmem:[%s4 + $0x24] sm:$0xf]
    %v60 = vld [vmem:[%s4 + $0x28] sm:$0xf]
    %v61 = vld [vmem:[%s4 + $0x2c] sm:$0xf]
    %v62 = vld [vmem:[%s4 + $0x30] sm:$0xf]
    %v63 = vld [vmem:[%s4 + $0x34] sm:$0xf]
    %v64 = vld [vmem:[%s4 + $0x38] sm:$0xf]
    %v65 = vld [vmem:[%s4 + $0x3c] sm:$0xf]
    %v66 = vld [vmem:[%s5] sm:$0xff]
    %v67 = vld [vmem:[%s5 + $0x8] sm:$0xff]
    %v68 = vld [vmem:[%s5 + $0x10] sm:$0xff]
    %v69 = vld [vmem:[%s5 + $0x18] sm:$0xff]
    %v70 = vld [vmem:[%s5 + $0x20] sm:$0xff]
    %v71 = vld [vmem:[%s5 + $0x28] sm:$0xff]
    %v72 = vld [vmem:[%s5 + $0x30] sm:$0xff]
    %v73 = vld [vmem:[%s5 + $0x38] sm:$0xff]
    %v74 = vld [vmem:[%s5 + $0x40] sm:$0xff]
    %v75 = vld [vmem:[%s5 + $0x48] sm:$0xff]
    %v76 = vld [vmem:[%s5 + $0x50] sm:$0xff]
    %v77 = vld [vmem:[%s5 + $0x58] sm:$0xff]
    %v78 = vld [vmem:[%s5 + $0x60] sm:$0xff]
    %v79 = vld [vmem:[%s5 + $0x68] sm:$0xff]
    %v80 = vld [vmem:[%s5 + $0x70] sm:$0xff]
    %v81 = vld [vmem:[%s5 + $0x78] sm:$0xff]
    %v82 = vld [vmem:[%s5 + $0x80] sm:$0xff]
    %v83 = vld [vmem:[%s5 + $0x88] sm:$0xff]
    %v84 = vld [vmem:[%s5 + $0x90] sm:$0xff]
    %v85 = vld [vmem:[%s5 + $0x98] sm:$0xff]
    %v86 = vld [vmem:[%s5 + $0xa0] sm:$0xff]
    %v87 = vld [vmem:[%s5 + $0xa8] sm:$0xff]
    %v88 = vld [vmem:[%s5 + $0xb0] sm:$0xff]
    %v89 = vld [vmem:[%s5 + $0xb8] sm:$0xff]
    %v90 = vld [vmem:[%s5 + $0xc0] sm:$0xff]
    %v91 = vld [vmem:[%s5 + $0xc8] sm:$0xff]
    %v92 = vld [vmem:[%s5 + $0xd0] sm:$0xff]
    %v93 = vld [vmem:[%s5 + $0xd8] sm:$0xff]
    %v94 = vld [vmem:[%s5 + $0xe0] sm:$0xff]
    %v95 = vld [vmem:[%s5 + $0xe8] sm:$0xff]
    %v96 = vld [vmem:[%s5 + $0xf0] sm:$0xff]
    %v97 = vld [vmem:[%s5 + $0xf8] sm:$0xff]
    %v98 = vld [vmem:[%s7] sm:$0xf]
    %v100 = vlaneseq
    %v101 = vshrl.u32 %v100, 7
    %v102 = vsub.s32 0, %v101
    %v103 = vrot.slane %v98, %v102
    %v104 = vlaneseq
    %v105 = vshrl.u32 %v104, 7
    %v106 = vsub.s32 1, %v105
    %v107 = vrot.slane %v98, %v106
    %v108 = vlaneseq
    %v109 = vshrl.u32 %v108, 7
    %v110 = vsub.s32 2, %v109
    %v111 = vrot.slane %v98, %v110
    %v112 = vlaneseq
    %v113 = vshrl.u32 %v112, 7
    %v114 = vsub.s32 3, %v113
    %v115 = vrot.slane %v98, %v114
    %v136 = vunpack.c.l.b16 %v50
    %v137 = vunpack.c.l.b16 %v51
    %v138 = vunpack.c.l.b16 %v52
    %v139 = vunpack.c.l.b16 %v53
    %v140 = vunpack.c.l.b16 %v54
    %v141 = vunpack.c.l.b16 %v55
    %v142 = vunpack.c.l.b16 %v56
    %v143 = vunpack.c.l.b16 %v57
    %v144 = vunpack.c.l.b16 %v58
    %v145 = vunpack.c.l.b16 %v59
    %v146 = vunpack.c.l.b16 %v60
    %v147 = vunpack.c.l.b16 %v61
    %v148 = vunpack.c.l.b16 %v62
    %v149 = vunpack.c.l.b16 %v63
    %v150 = vunpack.c.l.b16 %v64
    %v151 = vunpack.c.l.b16 %v65
    %v152 = vpack.c.b16 %v137, %v136
    %v153 = vpack.c.b16 %v139, %v138
    %v154 = vpack.c.b16 %v141, %v140
    %v155 = vpack.c.b16 %v143, %v142
    %v156 = vpack.c.b16 %v145, %v144
    %v157 = vpack.c.b16 %v147, %v146
    %v158 = vpack.c.b16 %v149, %v148
    %v159 = vpack.c.b16 %v151, %v150
    %v200 = vunpack.c.l.b16 %v66
    %v201 = vunpack.c.h.b16 %v66
    %v202 = vunpack.c.l.b16 %v67
    %v203 = vunpack.c.h.b16 %v67
    %v204 = vunpack.c.l.b16 %v68
    %v205 = vunpack.c.h.b16 %v68
    %v206 = vunpack.c.l.b16 %v69
    %v207 = vunpack.c.h.b16 %v69
    %v208 = vunpack.c.l.b16 %v70
    %v209 = vunpack.c.h.b16 %v70
    %v210 = vunpack.c.l.b16 %v71
    %v211 = vunpack.c.h.b16 %v71
    %v212 = vunpack.c.l.b16 %v72
    %v213 = vunpack.c.h.b16 %v72
    %v214 = vunpack.c.l.b16 %v73
    %v215 = vunpack.c.h.b16 %v73
    %v216 = vunpack.c.l.b16 %v74
    %v217 = vunpack.c.h.b16 %v74
    %v218 = vunpack.c.l.b16 %v75
    %v219 = vunpack.c.h.b16 %v75
    %v220 = vunpack.c.l.b16 %v76
    %v221 = vunpack.c.h.b16 %v76
    %v222 = vunpack.c.l.b16 %v77
    %v223 = vunpack.c.h.b16 %v77
    %v224 = vunpack.c.l.b16 %v78
    %v225 = vunpack.c.h.b16 %v78
    %v226 = vunpack.c.l.b16 %v79
    %v227 = vunpack.c.h.b16 %v79
    %v228 = vunpack.c.l.b16 %v80
    %v229 = vunpack.c.h.b16 %v80
    %v230 = vunpack.c.l.b16 %v81
    %v231 = vunpack.c.h.b16 %v81
    %v232 = vunpack.c.l.b16 %v82
    %v233 = vunpack.c.h.b16 %v82
    %v234 = vunpack.c.l.b16 %v83
    %v235 = vunpack.c.h.b16 %v83
    %v236 = vunpack.c.l.b16 %v84
    %v237 = vunpack.c.h.b16 %v84
    %v238 = vunpack.c.l.b16 %v85
    %v239 = vunpack.c.h.b16 %v85
    %v240 = vunpack.c.l.b16 %v86
    %v241 = vunpack.c.h.b16 %v86
    %v242 = vunpack.c.l.b16 %v87
    %v243 = vunpack.c.h.b16 %v87
    %v244 = vunpack.c.l.b16 %v88
    %v245 = vunpack.c.h.b16 %v88
    %v246 = vunpack.c.l.b16 %v89
    %v247 = vunpack.c.h.b16 %v89
    %v248 = vunpack.c.l.b16 %v90
    %v249 = vunpack.c.h.b16 %v90
    %v250 = vunpack.c.l.b16 %v91
    %v251 = vunpack.c.h.b16 %v91
    %v252 = vunpack.c.l.b16 %v92
    %v253 = vunpack.c.h.b16 %v92
    %v254 = vunpack.c.l.b16 %v93
    %v255 = vunpack.c.h.b16 %v93
    %v256 = vunpack.c.l.b16 %v94
    %v257 = vunpack.c.h.b16 %v94
    %v258 = vunpack.c.l.b16 %v95
    %v259 = vunpack.c.h.b16 %v95
    %v260 = vunpack.c.l.b16 %v96
    %v261 = vunpack.c.h.b16 %v96
    %v262 = vunpack.c.l.b16 %v97
    %v263 = vunpack.c.h.b16 %v97
    %v264 = vpack.c.b16 %v204, %v200
    %v265 = vpack.c.b16 %v205, %v201
    %v266 = vpack.c.b16 %v206, %v202
    %v267 = vpack.c.b16 %v207, %v203
    %v268 = vpack.c.b16 %v212, %v208
    %v269 = vpack.c.b16 %v213, %v209
    %v270 = vpack.c.b16 %v214, %v210
    %v271 = vpack.c.b16 %v215, %v211
    %v272 = vpack.c.b16 %v220, %v216
    %v273 = vpack.c.b16 %v221, %v217
    %v274 = vpack.c.b16 %v222, %v218
    %v275 = vpack.c.b16 %v223, %v219
    %v276 = vpack.c.b16 %v228, %v224
    %v277 = vpack.c.b16 %v229, %v225
    %v278 = vpack.c.b16 %v230, %v226
    %v279 = vpack.c.b16 %v231, %v227
    %v280 = vpack.c.b16 %v236, %v232
    %v281 = vpack.c.b16 %v237, %v233
    %v282 = vpack.c.b16 %v238, %v234
    %v283 = vpack.c.b16 %v239, %v235
    %v284 = vpack.c.b16 %v244, %v240
    %v285 = vpack.c.b16 %v245, %v241
    %v286 = vpack.c.b16 %v246, %v242
    %v287 = vpack.c.b16 %v247, %v243
    %v288 = vpack.c.b16 %v252, %v248
    %v289 = vpack.c.b16 %v253, %v249
    %v290 = vpack.c.b16 %v254, %v250
    %v291 = vpack.c.b16 %v255, %v251
    %v292 = vpack.c.b16 %v260, %v256
    %v293 = vpack.c.b16 %v261, %v257
    %v294 = vpack.c.b16 %v262, %v258
    %v295 = vpack.c.b16 %v263, %v259
    %328 = vmatprep.subr.bf16.mxu0 %v265
    %329 = vmatpush1.bf16.msra.mxu0 %v264
    %330 = vmatprep.subr.bf16.mxu0 %v269
    %331 = vmatpush1.bf16.msra.mxu0 %v268
    %332 = vmatprep.subr.bf16.mxu0 %v273
    %333 = vmatpush1.bf16.msra.mxu0 %v272
    %334 = vmatprep.subr.bf16.mxu0 %v277
    %335 = vmatpush1.bf16.msra.mxu0 %v276
    %336 = vmatprep.subr.bf16.mxu0 %v281
    %337 = vmatpush1.bf16.msra.mxu0 %v280
    %338 = vmatprep.subr.bf16.mxu0 %v285
    %339 = vmatpush1.bf16.msra.mxu0 %v284
    %340 = vmatprep.subr.bf16.mxu0 %v289
    %341 = vmatpush1.bf16.msra.mxu0 %v288
    %342 = vmatprep.subr.bf16.mxu0 %v293
    %343 = vmatpush1.bf16.msra.mxu0 %v292
    %344 = vmatprep.subr.bf16.mxu0 0
    %345 = vmatpush1.bf16.msra.mxu0 0
    %346 = vmatprep.subr.bf16.mxu0 0
    %347 = vmatpush1.bf16.msra.mxu0 0
    %348 = vmatprep.subr.bf16.mxu0 0
    %349 = vmatpush1.bf16.msra.mxu0 0
    %350 = vmatprep.subr.bf16.mxu0 0
    %351 = vmatpush1.bf16.msra.mxu0 0
    %352 = vmatprep.subr.bf16.mxu0 0
    %353 = vmatpush1.bf16.msra.mxu0 0
    %354 = vmatprep.subr.bf16.mxu0 0
    %355 = vmatpush1.bf16.msra.mxu0 0
    %356 = vmatprep.subr.bf16.mxu0 0
    %357 = vmatpush1.bf16.msra.mxu0 0
    %358 = vmatprep.subr.bf16.mxu0 0
    %359 = vmatpush1.bf16.msra.mxu0 0
    %360 = vmatprep.mubr.bf16.mxu0 0
    %361 = vmatmul.mubr.bf16.gmra.mrb[0].mxu0 %v152
    %v362 = vpop.f32.mrb[0].mxu0
    %v363 = vadd.f32 %v103, %v362
    %v364 = vpop.f32.mrb[0].mxu0
    %v365 = vadd.f32 %v107, %v364
    %v366 = vpop.f32.mrb[0].mxu0
    %v367 = vadd.f32 %v103, %v366
    %v368 = vpop.f32.mrb[0].mxu0
    %v369 = vadd.f32 %v107, %v368
    %370 = vmatprep.mubr.bf16.mxu0 0
    %371 = vmatmul.mubr.bf16.gmra.mrb[0].mxu0 %v153
    %v372 = vpop.f32.mrb[0].mxu0
    %v373 = vadd.f32 %v103, %v372
    %v374 = vpop.f32.mrb[0].mxu0
    %v375 = vadd.f32 %v107, %v374
    %v376 = vpop.f32.mrb[0].mxu0
    %v377 = vadd.f32 %v103, %v376
    %v378 = vpop.f32.mrb[0].mxu0
    %v379 = vadd.f32 %v107, %v378
    %380 = vmatprep.mubr.bf16.mxu0 0
    %381 = vmatmul.mubr.bf16.gmra.mrb[0].mxu0 %v154
    %v382 = vpop.f32.mrb[0].mxu0
    %v383 = vadd.f32 %v103, %v382
    %v384 = vpop.f32.mrb[0].mxu0
    %v385 = vadd.f32 %v107, %v384
    %v386 = vpop.f32.mrb[0].mxu0
    %v387 = vadd.f32 %v103, %v386
    %v388 = vpop.f32.mrb[0].mxu0
    %v389 = vadd.f32 %v107, %v388
    %390 = vmatprep.mubr.bf16.mxu0 0
    %391 = vmatmul.mubr.bf16.gmra.mrb[0].mxu0 %v155
    %v392 = vpop.f32.mrb[0].mxu0
    %v393 = vadd.f32 %v103, %v392
    %v394 = vpop.f32.mrb[0].mxu0
    %v395 = vadd.f32 %v107, %v394
    %v396 = vpop.f32.mrb[0].mxu0
    %v397 = vadd.f32 %v103, %v396
    %v398 = vpop.f32.mrb[0].mxu0
    %v399 = vadd.f32 %v107, %v398
    %400 = vmatprep.mubr.bf16.mxu0 0
    %401 = vmatmul.mubr.bf16.gmra.mrb[0].mxu0 %v156
    %v402 = vpop.f32.mrb[0].mxu0
    %v403 = vadd.f32 %v103, %v402
    %v404 = vpop.f32.mrb[0].mxu0
    %v405 = vadd.f32 %v107, %v404
    %v406 = vpop.f32.mrb[0].mxu0
    %v407 = vadd.f32 %v103, %v406
    %v408 = vpop.f32.mrb[0].mxu0
    %v409 = vadd.f32 %v107, %v408
    %410 = vmatprep.mubr.bf16.mxu0 0
    %411 = vmatmul.mubr.bf16.gmra.mrb[0].mxu0 %v157
    %v412 = vpop.f32.mrb[0].mxu0
    %v413 = vadd.f32 %v103, %v412
    %v414 = vpop.f32.mrb[0].mxu0
    %v415 = vadd.f32 %v107, %v414
    %v416 = vpop.f32.mrb[0].mxu0
    %v417 = vadd.f32 %v103, %v416
    %v418 = vpop.f32.mrb[0].mxu0
    %v419 = vadd.f32 %v107, %v418
    %420 = vmatprep.mubr.bf16.mxu0 0
    %421 = vmatmul.mubr.bf16.gmra.mrb[0].mxu0 %v158
    %v422 = vpop.f32.mrb[0].mxu0
    %v423 = vadd.f32 %v103, %v422
    %v424 = vpop.f32.mrb[0].mxu0
    %v425 = vadd.f32 %v107, %v424
    %v426 = vpop.f32.mrb[0].mxu0
    %v427 = vadd.f32 %v103, %v426
    %v428 = vpop.f32.mrb[0].mxu0
    %v429 = vadd.f32 %v107, %v428
    %430 = vmatprep.mubr.bf16.mxu0 0
    %431 = vmatmul.mubr.bf16.gmra.mrb[0].mxu0 %v159
    %v432 = vpop.f32.mrb[0].mxu0
    %v433 = vadd.f32 %v103, %v432
    %v434 = vpop.f32.mrb[0].mxu0
    %v435 = vadd.f32 %v107, %v434
    %v436 = vpop.f32.mrb[0].mxu0
    %v437 = vadd.f32 %v103, %v436
    %v438 = vpop.f32.mrb[0].mxu0
    %v439 = vadd.f32 %v107, %v438
    %440 = vdwg.mxu0
    %441 = vmatprep.subr.bf16.mxu0 %v267
    %442 = vmatpush1.bf16.msra.mxu0 %v266
    %443 = vmatprep.subr.bf16.mxu0 %v271
    %444 = vmatpush1.bf16.msra.mxu0 %v270
    %445 = vmatprep.subr.bf16.mxu0 %v275
    %446 = vmatpush1.bf16.msra.mxu0 %v274
    %447 = vmatprep.subr.bf16.mxu0 %v279
    %448 = vmatpush1.bf16.msra.mxu0 %v278
    %449 = vmatprep.subr.bf16.mxu0 %v283
    %450 = vmatpush1.bf16.msra.mxu0 %v282
    %451 = vmatprep.subr.bf16.mxu0 %v287
    %452 = vmatpush1.bf16.msra.mxu0 %v286
    %453 = vmatprep.subr.bf16.mxu0 %v291
    %454 = vmatpush1.bf16.msra.mxu0 %v290
    %455 = vmatprep.subr.bf16.mxu0 %v295
    %456 = vmatpush1.bf16.msra.mxu0 %v294
    %457 = vmatprep.subr.bf16.mxu0 0
    %458 = vmatpush1.bf16.msra.mxu0 0
    %459 = vmatprep.subr.bf16.mxu0 0
    %460 = vmatpush1.bf16.msra.mxu0 0
    %461 = vmatprep.subr.bf16.mxu0 0
    %462 = vmatpush1.bf16.msra.mxu0 0
    %463 = vmatprep.subr.bf16.mxu0 0
    %464 = vmatpush1.bf16.msra.mxu0 0
    %465 = vmatprep.subr.bf16.mxu0 0
    %466 = vmatpush1.bf16.msra.mxu0 0
    %467 = vmatprep.subr.bf16.mxu0 0
    %468 = vmatpush1.bf16.msra.mxu0 0
    %469 = vmatprep.subr.bf16.mxu0 0
    %470 = vmatpush1.bf16.msra.mxu0 0
    %471 = vmatprep.subr.bf16.mxu0 0
    %472 = vmatpush1.bf16.msra.mxu0 0
    %473 = vmatprep.mubr.bf16.mxu0 0
    %474 = vmatmul.mubr.bf16.gmra.mrb[0].mxu0 %v152
    %v475 = vpop.f32.mrb[0].mxu0
    %v476 = vadd.f32 %v111, %v475
    %v477 = vpop.f32.mrb[0].mxu0
    %v478 = vadd.f32 %v115, %v477
    %v479 = vpop.f32.mrb[0].mxu0
    %v480 = vadd.f32 %v111, %v479
    %v481 = vpop.f32.mrb[0].mxu0
    %v482 = vadd.f32 %v115, %v481
    %483 = vmatprep.mubr.bf16.mxu0 0
    %484 = vmatmul.mubr.bf16.gmra.mrb[0].mxu0 %v153
    %v485 = vpop.f32.mrb[0].mxu0
    %v486 = vadd.f32 %v111, %v485
    %v487 = vpop.f32.mrb[0].mxu0
    %v488 = vadd.f32 %v115, %v487
    %v489 = vpop.f32.mrb[0].mxu0
    %v490 = vadd.f32 %v111, %v489
    %v491 = vpop.f32.mrb[0].mxu0
    %v492 = vadd.f32 %v115, %v491
    %493 = vmatprep.mubr.bf16.mxu0 0
    %494 = vmatmul.mubr.bf16.gmra.mrb[0].mxu0 %v154
    %v495 = vpop.f32.mrb[0].mxu0
    %v496 = vadd.f32 %v111, %v495
    %v497 = vpop.f32.mrb[0].mxu0
    %v498 = vadd.f32 %v115, %v497
    %v499 = vpop.f32.mrb[0].mxu0
    %v500 = vadd.f32 %v111, %v499
    %v501 = vpop.f32.mrb[0].mxu0
    %v502 = vadd.f32 %v115, %v501
    %503 = vmatprep.mubr.bf16.mxu0 0
    %504 = vmatmul.mubr.bf16.gmra.mrb[0].mxu0 %v155
    %v505 = vpop.f32.mrb[0].mxu0
    %v506 = vadd.f32 %v111, %v505
    %v507 = vpop.f32.mrb[0].mxu0
    %v508 = vadd.f32 %v115, %v507
    %v509 = vpop.f32.mrb[0].mxu0
    %v510 = vadd.f32 %v111, %v509
    %v511 = vpop.f32.mrb[0].mxu0
    %v512 = vadd.f32 %v115, %v511
    %513 = vmatprep.mubr.bf16.mxu0 0
    %514 = vmatmul.mubr.bf16.gmra.mrb[0].mxu0 %v156
    %v515 = vpop.f32.mrb[0].mxu0
    %v516 = vadd.f32 %v111, %v515
    %v517 = vpop.f32.mrb[0].mxu0
    %v518 = vadd.f32 %v115, %v517
    %v519 = vpop.f32.mrb[0].mxu0
    %v520 = vadd.f32 %v111, %v519
    %v521 = vpop.f32.mrb[0].mxu0
    %v522 = vadd.f32 %v115, %v521
    %523 = vmatprep.mubr.bf16.mxu0 0
    %524 = vmatmul.mubr.bf16.gmra.mrb[0].mxu0 %v157
    %v525 = vpop.f32.mrb[0].mxu0
    %v526 = vadd.f32 %v111, %v525
    %v527 = vpop.f32.mrb[0].mxu0
    %v528 = vadd.f32 %v115, %v527
    %v529 = vpop.f32.mrb[0].mxu0
    %v530 = vadd.f32 %v111, %v529
    %v531 = vpop.f32.mrb[0].mxu0
    %v532 = vadd.f32 %v115, %v531
    %533 = vmatprep.mubr.bf16.mxu0 0
    %534 = vmatmul.mubr.bf16.gmra.mrb[0].mxu0 %v158
    %v535 = vpop.f32.mrb[0].mxu0
    %v536 = vadd.f32 %v111, %v535
    %v537 = vpop.f32.mrb[0].mxu0
    %v538 = vadd.f32 %v115, %v537
    %v539 = vpop.f32.mrb[0].mxu0
    %v540 = vadd.f32 %v111, %v539
    %v541 = vpop.f32.mrb[0].mxu0
    %v542 = vadd.f32 %v115, %v541
    %543 = vmatprep.mubr.bf16.mxu0 0
    %544 = vmatmul.mubr.bf16.gmra.mrb[0].mxu0 %v159
    %v545 = vpop.f32.mrb[0].mxu0
    %v546 = vadd.f32 %v111, %v545
    %v547 = vpop.f32.mrb[0].mxu0
    %v548 = vadd.f32 %v115, %v547
    %v549 = vpop.f32.mrb[0].mxu0
    %v550 = vadd.f32 %v111, %v549
    %v551 = vpop.f32.mrb[0].mxu0
    %v552 = vadd.f32 %v115, %v551
    %553 = vdwg.mxu0
    %v554 = vpack.c.bf16 %v367, %v363
    %v555 = vpack.c.bf16 %v369, %v365
    %v556 = vpack.c.bf16 %v480, %v476
    %v557 = vpack.c.bf16 %v482, %v478
    %v558 = vpack.c.bf16 %v377, %v373
    %v559 = vpack.c.bf16 %v379, %v375
    %v560 = vpack.c.bf16 %v490, %v486
    %v561 = vpack.c.bf16 %v492, %v488
    %v562 = vpack.c.bf16 %v387, %v383
    %v563 = vpack.c.bf16 %v389, %v385
    %v564 = vpack.c.bf16 %v500, %v496
    %v565 = vpack.c.bf16 %v502, %v498
    %v566 = vpack.c.bf16 %v397, %v393
    %v567 = vpack.c.bf16 %v399, %v395
    %v568 = vpack.c.bf16 %v510, %v506
    %v569 = vpack.c.bf16 %v512, %v508
    %v570 = vpack.c.bf16 %v407, %v403
    %v571 = vpack.c.bf16 %v409, %v405
    %v572 = vpack.c.bf16 %v520, %v516
    %v573 = vpack.c.bf16 %v522, %v518
    %v574 = vpack.c.bf16 %v417, %v413
    %v575 = vpack.c.bf16 %v419, %v415
    %v576 = vpack.c.bf16 %v530, %v526
    %v577 = vpack.c.bf16 %v532, %v528
    %v578 = vpack.c.bf16 %v427, %v423
    %v579 = vpack.c.bf16 %v429, %v425
    %v580 = vpack.c.bf16 %v540, %v536
    %v581 = vpack.c.bf16 %v542, %v538
    %v582 = vpack.c.bf16 %v437, %v433
    %v583 = vpack.c.bf16 %v439, %v435
    %v584 = vpack.c.bf16 %v550, %v546
    %v585 = vpack.c.bf16 %v552, %v548
    %586 = vst [vmem:[#allocation2] sm:$0xff] %v554
    %587 = vst [vmem:[#allocation2 + $0x8] sm:$0xff] %v555
    %588 = vst [vmem:[#allocation2 + $0x10] sm:$0xff] %v556
    %589 = vst [vmem:[#allocation2 + $0x18] sm:$0xff] %v557
    %590 = vst [vmem:[#allocation2 + $0x20] sm:$0xff] %v558
    %591 = vst [vmem:[#allocation2 + $0x28] sm:$0xff] %v559
    %592 = vst [vmem:[#allocation2 + $0x30] sm:$0xff] %v560
    %593 = vst [vmem:[#allocation2 + $0x38] sm:$0xff] %v561
    %594 = vst [vmem:[#allocation2 + $0x40] sm:$0xff] %v562
    %595 = vst [vmem:[#allocation2 + $0x48] sm:$0xff] %v563
    %596 = vst [vmem:[#allocation2 + $0x50] sm:$0xff] %v564
    %597 = vst [vmem:[#allocation2 + $0x58] sm:$0xff] %v565
    %598 = vst [vmem:[#allocation2 + $0x60] sm:$0xff] %v566
    %599 = vst [vmem:[#allocation2 + $0x68] sm:$0xff] %v567
    %600 = vst [vmem:[#allocation2 + $0x70] sm:$0xff] %v568
    %601 = vst [vmem:[#allocation2 + $0x78] sm:$0xff] %v569
    %602 = vst [vmem:[#allocation2 + $0x80] sm:$0xff] %v570
    %603 = vst [vmem:[#allocation2 + $0x88] sm:$0xff] %v571
    %604 = vst [vmem:[#allocation2 + $0x90] sm:$0xff] %v572
    %605 = vst [vmem:[#allocation2 + $0x98] sm:$0xff] %v573
    %606 = vst [vmem:[#allocation2 + $0xa0] sm:$0xff] %v574
    %607 = vst [vmem:[#allocation2 + $0xa8] sm:$0xff] %v575
    %608 = vst [vmem:[#allocation2 + $0xb0] sm:$0xff] %v576
    %609 = vst [vmem:[#allocation2 + $0xb8] sm:$0xff] %v577
    %610 = vst [vmem:[#allocation2 + $0xc0] sm:$0xff] %v578
    %611 = vst [vmem:[#allocation2 + $0xc8] sm:$0xff] %v579
    %612 = vst [vmem:[#allocation2 + $0xd0] sm:$0xff] %v580
    %613 = vst [vmem:[#allocation2 + $0xd8] sm:$0xff] %v581
    %614 = vst [vmem:[#allocation2 + $0xe0] sm:$0xff] %v582
    %615 = vst [vmem:[#allocation2 + $0xe8] sm:$0xff] %v583
    %616 = vst [vmem:[#allocation2 + $0xf0] sm:$0xff] %v584
    %617 = vst [vmem:[#allocation2 + $0xf8] sm:$0xff] %v585
    %v618 = vlaneseq
    %v619 = vand.u32 %v618, 127
    %v620 = vld [vmem:[%s9] sm:$0x1]
    %v622 = vlaneseq
    %v623 = vshrl.u32 %v622, 7
    %v624 = vsub.s32 0, %v623
    %v625 = vrot.slane %v620, %v624
    %627 = vst [vmem:[#allocation6] sm:$0xff] 0.0
    %v628 = vld [vmem:[%s1] sm:$0xff]
    %629 = vset.pattern.permute.xlu0 0
    %630 = vperm.xlu0 %629, %v628
    %v631 = vpop.permute.xlu0 %630
    %vm632 = vcmp.eq.s32.totalorder %v619, %v631
    %v633 = vsel %vm632, 1, 0
    %v634 = vcvt.s32.f32 %v633
    %v635 = vpack.c.bf16 %v634, %v634
    %v636 = vld [vmem:[%s2] sm:$0xff]
    %v637 = vld [vmem:[%s3] sm:$0xff]
    loop: start=1, step=1, limit=8
    $region46: #{seq2seq_forward.3} parent=1 // loop_pre_header
      _
    $region47: #{seq2seq_forward.3} parent=1 // loop_header
      %s639 = sphi 1, %s643
      %p640 = scmp.ge.s32.totalorder %s639, 8
      %v644 = vphi %v636, %v1059
      %v645 = vphi %v637, %v1057
      %v646 = vphi %v635, %v1204
    $region48: #{seq2seq_forward.3} parent=1 // loop_header_branch
      %642 = sbr.rel (%p640) target = $region52
    $region49: #{seq2seq_forward.3} parent=1 // loop_body
      %v647 = vld [vmem:[#allocation2] sm:$0xff]
      %v648 = vld [vmem:[#allocation2 + $0x8] sm:$0xff]
      %v649 = vld [vmem:[#allocation2 + $0x10] sm:$0xff]
      %v650 = vld [vmem:[#allocation2 + $0x18] sm:$0xff]
      %v651 = vld [vmem:[#allocation2 + $0x20] sm:$0xff]
      %v652 = vld [vmem:[#allocation2 + $0x28] sm:$0xff]
      %v653 = vld [vmem:[#allocation2 + $0x30] sm:$0xff]
      %v654 = vld [vmem:[#allocation2 + $0x38] sm:$0xff]
      %v655 = vld [vmem:[#allocation2 + $0x40] sm:$0xff]
      %v656 = vld [vmem:[#allocation2 + $0x48] sm:$0xff]
      %v657 = vld [vmem:[#allocation2 + $0x50] sm:$0xff]
      %v658 = vld [vmem:[#allocation2 + $0x58] sm:$0xff]
      %v659 = vld [vmem:[#allocation2 + $0x60] sm:$0xff]
      %v660 = vld [vmem:[#allocation2 + $0x68] sm:$0xff]
      %v661 = vld [vmem:[#allocation2 + $0x70] sm:$0xff]
      %v662 = vld [vmem:[#allocation2 + $0x78] sm:$0xff]
      %v663 = vld [vmem:[#allocation2 + $0x80] sm:$0xff]
      %v664 = vld [vmem:[#allocation2 + $0x88] sm:$0xff]
      %v665 = vld [vmem:[#allocation2 + $0x90] sm:$0xff]
      %v666 = vld [vmem:[#allocation2 + $0x98] sm:$0xff]
      %v667 = vld [vmem:[#allocation2 + $0xa0] sm:$0xff]
      %v668 = vld [vmem:[#allocation2 + $0xa8] sm:$0xff]
      %v669 = vld [vmem:[#allocation2 + $0xb0] sm:$0xff]
      %v670 = vld [vmem:[#allocation2 + $0xb8] sm:$0xff]
      %v671 = vld [vmem:[#allocation2 + $0xc0] sm:$0xff]
      %v672 = vld [vmem:[#allocation2 + $0xc8] sm:$0xff]
      %v673 = vld [vmem:[#allocation2 + $0xd0] sm:$0xff]
      %v674 = vld [vmem:[#allocation2 + $0xd8] sm:$0xff]
      %v675 = vld [vmem:[#allocation2 + $0xe0] sm:$0xff]
      %v676 = vld [vmem:[#allocation2 + $0xe8] sm:$0xff]
      %v677 = vld [vmem:[#allocation2 + $0xf0] sm:$0xff]
      %v678 = vld [vmem:[#allocation2 + $0xf8] sm:$0xff]
      %v679 = vpack.c.bf16 %v644, %v644
      %v680 = vld [vmem:[%s6] sm:$0xff]
      %v681 = vld [vmem:[%s6 + $0x8] sm:$0xff]
      %v682 = vld [vmem:[%s6 + $0x10] sm:$0xff]
      %v683 = vld [vmem:[%s6 + $0x18] sm:$0xff]
      %v684 = vld [vmem:[%s6 + $0x20] sm:$0xff]
      %v685 = vld [vmem:[%s6 + $0x28] sm:$0xff]
      %v686 = vld [vmem:[%s6 + $0x30] sm:$0xff]
      %v687 = vld [vmem:[%s6 + $0x38] sm:$0xff]
      %v688 = vld [vmem:[%s6 + $0x40] sm:$0xff]
      %v689 = vld [vmem:[%s6 + $0x48] sm:$0xff]
      %v690 = vld [vmem:[%s6 + $0x50] sm:$0xff]
      %v691 = vld [vmem:[%s6 + $0x58] sm:$0xff]
      %v692 = vld [vmem:[%s6 + $0x60] sm:$0xff]
      %v693 = vld [vmem:[%s6 + $0x68] sm:$0xff]
      %v694 = vld [vmem:[%s6 + $0x70] sm:$0xff]
      %v695 = vld [vmem:[%s6 + $0x78] sm:$0xff]
      %v696 = vld [vmem:[%s6 + $0x80] sm:$0xff]
      %v697 = vld [vmem:[%s6 + $0x88] sm:$0xff]
      %v698 = vld [vmem:[%s6 + $0x90] sm:$0xff]
      %v699 = vld [vmem:[%s6 + $0x98] sm:$0xff]
      %v700 = vld [vmem:[%s6 + $0xa0] sm:$0xff]
      %v701 = vld [vmem:[%s6 + $0xa8] sm:$0xff]
      %v702 = vld [vmem:[%s6 + $0xb0] sm:$0xff]
      %v703 = vld [vmem:[%s6 + $0xb8] sm:$0xff]
      %v704 = vld [vmem:[%s6 + $0xc0] sm:$0xff]
      %v705 = vld [vmem:[%s6 + $0xc8] sm:$0xff]
      %v706 = vld [vmem:[%s6 + $0xd0] sm:$0xff]
      %v707 = vld [vmem:[%s6 + $0xd8] sm:$0xff]
      %v708 = vld [vmem:[%s6 + $0xe0] sm:$0xff]
      %v709 = vld [vmem:[%s6 + $0xe8] sm:$0xff]
      %v710 = vld [vmem:[%s6 + $0xf0] sm:$0xff]
      %v711 = vld [vmem:[%s6 + $0xf8] sm:$0xff]
      %v744 = vunpack.c.l.b16 %v680
      %v745 = vunpack.c.h.b16 %v680
      %v746 = vunpack.c.l.b16 %v681
      %v747 = vunpack.c.h.b16 %v681
      %v748 = vunpack.c.l.b16 %v682
      %v749 = vunpack.c.h.b16 %v682
      %v750 = vunpack.c.l.b16 %v683
      %v751 = vunpack.c.h.b16 %v683
      %v752 = vunpack.c.l.b16 %v684
      %v753 = vunpack.c.h.b16 %v684
      %v754 = vunpack.c.l.b16 %v685
      %v755 = vunpack.c.h.b16 %v685
      %v756 = vunpack.c.l.b16 %v686
      %v757 = vunpack.c.h.b16 %v686
      %v758 = vunpack.c.l.b16 %v687
      %v759 = vunpack.c.h.b16 %v687
      %v760 = vunpack.c.l.b16 %v688
      %v761 = vunpack.c.h.b16 %v688
      %v762 = vunpack.c.l.b16 %v689
      %v763 = vunpack.c.h.b16 %v689
      %v764 = vunpack.c.l.b16 %v690
      %v765 = vunpack.c.h.b16 %v690
      %v766 = vunpack.c.l.b16 %v691
      %v767 = vunpack.c.h.b16 %v691
      %v768 = vunpack.c.l.b16 %v692
      %v769 = vunpack.c.h.b16 %v692
      %v770 = vunpack.c.l.b16 %v693
      %v771 = vunpack.c.h.b16 %v693
      %v772 = vunpack.c.l.b16 %v694
      %v773 = vunpack.c.h.b16 %v694
      %v774 = vunpack.c.l.b16 %v695
      %v775 = vunpack.c.h.b16 %v695
      %v776 = vunpack.c.l.b16 %v696
      %v777 = vunpack.c.h.b16 %v696
      %v778 = vunpack.c.l.b16 %v697
      %v779 = vunpack.c.h.b16 %v697
      %v780 = vunpack.c.l.b16 %v698
      %v781 = vunpack.c.h.b16 %v698
      %v782 = vunpack.c.l.b16 %v699
      %v783 = vunpack.c.h.b16 %v699
      %v784 = vunpack.c.l.b16 %v700
      %v785 = vunpack.c.h.b16 %v700
      %v786 = vunpack.c.l.b16 %v701
      %v787 = vunpack.c.h.b16 %v701
      %v788 = vunpack.c.l.b16 %v702
      %v789 = vunpack.c.h.b16 %v702
      %v790 = vunpack.c.l.b16 %v703
      %v791 = vunpack.c.h.b16 %v703
      %v792 = vunpack.c.l.b16 %v704
      %v793 = vunpack.c.h.b16 %v704
      %v794 = vunpack.c.l.b16 %v705
      %v795 = vunpack.c.h.b16 %v705
      %v796 = vunpack.c.l.b16 %v706
      %v797 = vunpack.c.h.b16 %v706
      %v798 = vunpack.c.l.b16 %v707
      %v799 = vunpack.c.h.b16 %v707
      %v800 = vunpack.c.l.b16 %v708
      %v801 = vunpack.c.h.b16 %v708
      %v802 = vunpack.c.l.b16 %v709
      %v803 = vunpack.c.h.b16 %v709
      %v804 = vunpack.c.l.b16 %v710
      %v805 = vunpack.c.h.b16 %v710
      %v806 = vunpack.c.l.b16 %v711
      %v807 = vunpack.c.h.b16 %v711
      %v808 = vpack.c.b16 %v748, %v744
      %v809 = vpack.c.b16 %v749, %v745
      %v810 = vpack.c.b16 %v750, %v746
      %v811 = vpack.c.b16 %v751, %v747
      %v812 = vpack.c.b16 %v756, %v752
      %v813 = vpack.c.b16 %v757, %v753
      %v814 = vpack.c.b16 %v758, %v754
      %v815 = vpack.c.b16 %v759, %v755
      %v816 = vpack.c.b16 %v764, %v760
      %v817 = vpack.c.b16 %v765, %v761
      %v818 = vpack.c.b16 %v766, %v762
      %v819 = vpack.c.b16 %v767, %v763
      %v820 = vpack.c.b16 %v772, %v768
      %v821 = vpack.c.b16 %v773, %v769
      %v822 = vpack.c.b16 %v774, %v770
      %v823 = vpack.c.b16 %v775, %v771
      %v824 = vpack.c.b16 %v780, %v776
      %v825 = vpack.c.b16 %v781, %v777
      %v826 = vpack.c.b16 %v782, %v778
      %v827 = vpack.c.b16 %v783, %v779
      %v828 = vpack.c.b16 %v788, %v784
      %v829 = vpack.c.b16 %v789, %v785
      %v830 = vpack.c.b16 %v790, %v786
      %v831 = vpack.c.b16 %v791, %v787
      %v832 = vpack.c.b16 %v796, %v792
      %v833 = vpack.c.b16 %v797, %v793
      %v834 = vpack.c.b16 %v798, %v794
      %v835 = vpack.c.b16 %v799, %v795
      %v836 = vpack.c.b16 %v804, %v800
      %v837 = vpack.c.b16 %v805, %v801
      %v838 = vpack.c.b16 %v806, %v802
      %v839 = vpack.c.b16 %v807, %v803
      %872 = vmatprep.subr.bf16.mxu0 %v809
      %873 = vmatpush1.bf16.msra.mxu0 %v808
      %874 = vmatprep.subr.bf16.mxu0 %v813
      %875 = vmatpush1.bf16.msra.mxu0 %v812
      %876 = vmatprep.subr.bf16.mxu0 %v817
      %877 = vmatpush1.bf16.msra.mxu0 %v816
      %878 = vmatprep.subr.bf16.mxu0 %v821
      %879 = vmatpush1.bf16.msra.mxu0 %v820
      %880 = vmatprep.subr.bf16.mxu0 %v825
      %881 = vmatpush1.bf16.msra.mxu0 %v824
      %882 = vmatprep.subr.bf16.mxu0 %v829
      %883 = vmatpush1.bf16.msra.mxu0 %v828
      %884 = vmatprep.subr.bf16.mxu0 %v833
      %885 = vmatpush1.bf16.msra.mxu0 %v832
      %886 = vmatprep.subr.bf16.mxu0 %v837
      %887 = vmatpush1.bf16.msra.mxu0 %v836
      %888 = vmatprep.subr.bf16.mxu0 0
      %889 = vmatpush1.bf16.msra.mxu0 0
      %890 = vmatprep.subr.bf16.mxu0 0
      %891 = vmatpush1.bf16.msra.mxu0 0
      %892 = vmatprep.subr.bf16.mxu0 0
      %893 = vmatpush1.bf16.msra.mxu0 0
      %894 = vmatprep.subr.bf16.mxu0 0
      %895 = vmatpush1.bf16.msra.mxu0 0
      %896 = vmatprep.subr.bf16.mxu0 0
      %897 = vmatpush1.bf16.msra.mxu0 0
      %898 = vmatprep.subr.bf16.mxu0 0
      %899 = vmatpush1.bf16.msra.mxu0 0
      %900 = vmatprep.subr.bf16.mxu0 0
      %901 = vmatpush1.bf16.msra.mxu0 0
      %902 = vmatprep.subr.bf16.mxu0 0
      %903 = vmatpush1.bf16.msra.mxu0 0
      %904 = vmatprep.mubr.bf16.mxu0 0
      %905 = vmatmul.mubr.bf16.gmra.mrb[0].mxu0 %v679
      %v906 = vpop.f32.mrb[0].mxu0
      %v907 = vadd.f32 0.0, %v906
      %v908 = vpop.f32.mrb[0].mxu0
      %v909 = vadd.f32 0.0, %v908
      %v910 = vpop.f32.mrb[0].mxu0
      %v911 = vpop.f32.mrb[0].mxu0
      %912 = vdwg.mxu0
      %913 = vmatprep.subr.bf16.mxu0 %v811
      %914 = vmatpush1.bf16.msra.mxu0 %v810
      %915 = vmatprep.subr.bf16.mxu0 %v815
      %916 = vmatpush1.bf16.msra.mxu0 %v814
      %917 = vmatprep.subr.bf16.mxu0 %v819
      %918 = vmatpush1.bf16.msra.mxu0 %v818
      %919 = vmatprep.subr.bf16.mxu0 %v823
      %920 = vmatpush1.bf16.msra.mxu0 %v822
      %921 = vmatprep.subr.bf16.mxu0 %v827
      %922 = vmatpush1.bf16.msra.mxu0 %v826
      %923 = vmatprep.subr.bf16.mxu0 %v831
      %924 = vmatpush1.bf16.msra.mxu0 %v830
      %925 = vmatprep.subr.bf16.mxu0 %v835
      %926 = vmatpush1.bf16.msra.mxu0 %v834
      %927 = vmatprep.subr.bf16.mxu0 %v839
      %928 = vmatpush1.bf16.msra.mxu0 %v838
      %929 = vmatprep.subr.bf16.mxu0 0
      %930 = vmatpush1.bf16.msra.mxu0 0
      %931 = vmatprep.subr.bf16.mxu0 0
      %932 = vmatpush1.bf16.msra.mxu0 0
      %933 = vmatprep.subr.bf16.mxu0 0
      %934 = vmatpush1.bf16.msra.mxu0 0
      %935 = vmatprep.subr.bf16.mxu0 0
      %936 = vmatpush1.bf16.msra.mxu0 0
      %937 = vmatprep.subr.bf16.mxu0 0
      %938 = vmatpush1.bf16.msra.mxu0 0
      %939 = vmatprep.subr.bf16.mxu0 0
      %940 = vmatpush1.bf16.msra.mxu0 0
      %941 = vmatprep.subr.bf16.mxu0 0
      %942 = vmatpush1.bf16.msra.mxu0 0
      %943 = vmatprep.subr.bf16.mxu0 0
      %944 = vmatpush1.bf16.msra.mxu0 0
      %945 = vmatprep.mubr.bf16.mxu0 0
      %946 = vmatmul.mubr.bf16.gmra.mrb[0].mxu0 %v679
      %v947 = vpop.f32.mrb[0].mxu0
      %v948 = vadd.f32 0.0, %v947
      %v949 = vpop.f32.mrb[0].mxu0
      %v950 = vadd.f32 0.0, %v949
      %v951 = vpop.f32.mrb[0].mxu0
      %v952 = vpop.f32.mrb[0].mxu0
      %953 = vdwg.mxu0
      %954 = vmatprep.subr.bf16.mxu0 %v648
      %955 = vmatpush1.bf16.msra.mxu0 %v647
      %956 = vmatprep.subr.bf16.mxu0 %v652
      %957 = vmatpush1.bf16.msra.mxu0 %v651
      %958 = vmatprep.subr.bf16.mxu0 %v656
      %959 = vmatpush1.bf16.msra.mxu0 %v655
      %960 = vmatprep.subr.bf16.mxu0 %v660
      %961 = vmatpush1.bf16.msra.mxu0 %v659
      %962 = vmatprep.subr.bf16.mxu0 %v664
      %963 = vmatpush1.bf16.msra.mxu0 %v663
      %964 = vmatprep.subr.bf16.mxu0 %v668
      %965 = vmatpush1.bf16.msra.mxu0 %v667
      %966 = vmatprep.subr.bf16.mxu0 %v672
      %967 = vmatpush1.bf16.msra.mxu0 %v671
      %968 = vmatprep.subr.bf16.mxu0 %v676
      %969 = vmatpush1.bf16.msra.mxu0 %v675
      %970 = vmatprep.subr.bf16.mxu0 0
      %971 = vmatpush1.bf16.msra.mxu0 0
      %972 = vmatprep.subr.bf16.mxu0 0
      %973 = vmatpush1.bf16.msra.mxu0 0
      %974 = vmatprep.subr.bf16.mxu0 0
      %975 = vmatpush1.bf16.msra.mxu0 0
      %976 = vmatprep.subr.bf16.mxu0 0
      %977 = vmatpush1.bf16.msra.mxu0 0
      %978 = vmatprep.subr.bf16.mxu0 0
      %979 = vmatpush1.bf16.msra.mxu0 0
      %980 = vmatprep.subr.bf16.mxu0 0
      %981 = vmatpush1.bf16.msra.mxu0 0
      %982 = vmatprep.subr.bf16.mxu0 0
      %983 = vmatpush1.bf16.msra.mxu0 0
      %984 = vmatprep.subr.bf16.mxu0 0
      %985 = vmatpush1.bf16.msra.mxu0 0
      %986 = vmatprep.mubr.bf16.mxu0 0
      %987 = vmatmul.mubr.bf16.gmra.mrb[0].mxu0 %v646
      %v988 = vpop.f32.mrb[0].mxu0
      %v989 = vadd.f32 %v907, %v988
      %v990 = vpop.f32.mrb[0].mxu0
      %v991 = vadd.f32 %v909, %v990
      %v992 = vpop.f32.mrb[0].mxu0
      %v993 = vpop.f32.mrb[0].mxu0
      %994 = vdwg.mxu0
      %995 = vmatprep.subr.bf16.mxu0 %v650
      %996 = vmatpush1.bf16.msra.mxu0 %v649
      %997 = vmatprep.subr.bf16.mxu0 %v654
      %998 = vmatpush1.bf16.msra.mxu0 %v653
      %999 = vmatprep.subr.bf16.mxu0 %v658
      %1000 = vmatpush1.bf16.msra.mxu0 %v657
      %1001 = vmatprep.subr.bf16.mxu0 %v662
      %1002 = vmatpush1.bf16.msra.mxu0 %v661
      %1003 = vmatprep.subr.bf16.mxu0 %v666
      %1004 = vmatpush1.bf16.msra.mxu0 %v665
      %1005 = vmatprep.subr.bf16.mxu0 %v670
      %1006 = vmatpush1.bf16.msra.mxu0 %v669
      %1007 = vmatprep.subr.bf16.mxu0 %v674
      %1008 = vmatpush1.bf16.msra.mxu0 %v673
      %1009 = vmatprep.subr.bf16.mxu0 %v678
      %1010 = vmatpush1.bf16.msra.mxu0 %v677
      %1011 = vmatprep.subr.bf16.mxu0 0
      %1012 = vmatpush1.bf16.msra.mxu0 0
      %1013 = vmatprep.subr.bf16.mxu0 0
      %1014 = vmatpush1.bf16.msra.mxu0 0
      %1015 = vmatprep.subr.bf16.mxu0 0
      %1016 = vmatpush1.bf16.msra.mxu0 0
      %1017 = vmatprep.subr.bf16.mxu0 0
      %1018 = vmatpush1.bf16.msra.mxu0 0
      %1019 = vmatprep.subr.bf16.mxu0 0
      %1020 = vmatpush1.bf16.msra.mxu0 0
      %1021 = vmatprep.subr.bf16.mxu0 0
      %1022 = vmatpush1.bf16.msra.mxu0 0
      %1023 = vmatprep.subr.bf16.mxu0 0
      %1024 = vmatpush1.bf16.msra.mxu0 0
      %1025 = vmatprep.subr.bf16.mxu0 0
      %1026 = vmatpush1.bf16.msra.mxu0 0
      %1027 = vmatprep.mubr.bf16.mxu0 0
      %1028 = vmatmul.mubr.bf16.gmra.mrb[0].mxu0 %v646
      %v1029 = vpop.f32.mrb[0].mxu0
      %v1030 = vadd.f32 %v948, %v1029
      %v1031 = vpop.f32.mrb[0].mxu0
      %v1032 = vadd.f32 %v950, %v1031
      %v1033 = vpop.f32.mrb[0].mxu0
      %v1034 = vpop.f32.mrb[0].mxu0
      %1035 = vdwg.mxu0
      %v1036 = vxor.u32 %v989, 2147483648
      %v1037 = vmul.f32 %v1036, 1.442695
      %v1038 = vpow.pop %v1037
      %v1039 = vadd.f32 %v1038, 1.0
      %v1040 = vrcp.pop %v1039
      %v1041 = vmul.f32 1.0, %v1040
      %v1042 = vxor.u32 %v991, 2147483648
      %v1043 = vmul.f32 %v1042, 1.442695
      %v1044 = vpow.pop %v1043
      %v1045 = vadd.f32 %v1044, 1.0
      %v1046 = vrcp.pop %v1045
      %v1047 = vmul.f32 1.0, %v1046
      %v1048 = vtanh.pop %v1030
      %v1049 = vxor.u32 %v1032, 2147483648
      %v1050 = vmul.f32 %v1049, 1.442695
      %v1051 = vpow.pop %v1050
      %v1052 = vadd.f32 %v1051, 1.0
      %v1053 = vrcp.pop %v1052
      %v1054 = vmul.f32 1.0, %v1053
      %v1055 = vmul.f32 %v1047, %v645
      %v1056 = vmul.f32 %v1041, %v1048
      %v1057 = vadd.f32 %v1055, %v1056
      %v1058 = vtanh.pop %v1057
      %v1059 = vmul.f32 %v1054, %v1058
      %v1060 = vpack.c.bf16 %v1059, %v1059
      %v1061 = vld [vmem:[%s8] sm:$0xf]
      %v1062 = vld [vmem:[%s8 + $0x4] sm:$0xf]
      %v1063 = vld [vmem:[%s8 + $0x8] sm:$0xf]
      %v1064 = vld [vmem:[%s8 + $0xc] sm:$0xf]
      %v1065 = vld [vmem:[%s8 + $0x10] sm:$0xf]
      %v1066 = vld [vmem:[%s8 + $0x14] sm:$0xf]
      %v1067 = vld [vmem:[%s8 + $0x18] sm:$0xf]
      %v1068 = vld [vmem:[%s8 + $0x1c] sm:$0xf]
      %v1069 = vld [vmem:[%s8 + $0x20] sm:$0xf]
      %v1070 = vld [vmem:[%s8 + $0x24] sm:$0xf]
      %v1071 = vld [vmem:[%s8 + $0x28] sm:$0xf]
      %v1072 = vld [vmem:[%s8 + $0x2c] sm:$0xf]
      %v1073 = vld [vmem:[%s8 + $0x30] sm:$0xf]
      %v1074 = vld [vmem:[%s8 + $0x34] sm:$0xf]
      %v1075 = vld [vmem:[%s8 + $0x38] sm:$0xf]
      %v1076 = vld [vmem:[%s8 + $0x3c] sm:$0xf]
      %v1093 = vunpack.c.l.b16 %v1061
      %v1094 = vunpack.c.l.b16 %v1062
      %v1095 = vunpack.c.l.b16 %v1063
      %v1096 = vunpack.c.l.b16 %v1064
      %v1097 = vunpack.c.l.b16 %v1065
      %v1098 = vunpack.c.l.b16 %v1066
      %v1099 = vunpack.c.l.b16 %v1067
      %v1100 = vunpack.c.l.b16 %v1068
      %v1101 = vunpack.c.l.b16 %v1069
      %v1102 = vunpack.c.l.b16 %v1070
      %v1103 = vunpack.c.l.b16 %v1071
      %v1104 = vunpack.c.l.b16 %v1072
      %v1105 = vunpack.c.l.b16 %v1073
      %v1106 = vunpack.c.l.b16 %v1074
      %v1107 = vunpack.c.l.b16 %v1075
      %v1108 = vunpack.c.l.b16 %v1076
      %v1109 = vpack.c.b16 %v1094, %v1093
      %v1110 = vpack.c.b16 %v1096, %v1095
      %v1111 = vpack.c.b16 %v1098, %v1097
      %v1112 = vpack.c.b16 %v1100, %v1099
      %v1113 = vpack.c.b16 %v1102, %v1101
      %v1114 = vpack.c.b16 %v1104, %v1103
      %v1115 = vpack.c.b16 %v1106, %v1105
      %v1116 = vpack.c.b16 %v1108, %v1107
      %1125 = vmatprep.subr.bf16.mxu0 0
      %1126 = vmatpush1.bf16.msra.mxu0 %v1109
      %1127 = vmatprep.subr.bf16.mxu0 0
      %1128 = vmatpush1.bf16.msra.mxu0 %v1110
      %1129 = vmatprep.subr.bf16.mxu0 0
      %1130 = vmatpush1.bf16.msra.mxu0 %v1111
      %1131 = vmatprep.subr.bf16.mxu0 0
      %1132 = vmatpush1.bf16.msra.mxu0 %v1112
      %1133 = vmatprep.subr.bf16.mxu0 0
      %1134 = vmatpush1.bf16.msra.mxu0 %v1113
      %1135 = vmatprep.subr.bf16.mxu0 0
      %1136 = vmatpush1.bf16.msra.mxu0 %v1114
      %1137 = vmatprep.subr.bf16.mxu0 0
      %1138 = vmatpush1.bf16.msra.mxu0 %v1115
      %1139 = vmatprep.subr.bf16.mxu0 0
      %1140 = vmatpush1.bf16.msra.mxu0 %v1116
      %1141 = vmatprep.subr.bf16.mxu0 0
      %1142 = vmatpush1.bf16.msra.mxu0 0
      %1143 = vmatprep.subr.bf16.mxu0 0
      %1144 = vmatpush1.bf16.msra.mxu0 0
      %1145 = vmatprep.subr.bf16.mxu0 0
      %1146 = vmatpush1.bf16.msra.mxu0 0
      %1147 = vmatprep.subr.bf16.mxu0 0
      %1148 = vmatpush1.bf16.msra.mxu0 0
      %1149 = vmatprep.subr.bf16.mxu0 0
      %1150 = vmatpush1.bf16.msra.mxu0 0
      %1151 = vmatprep.subr.bf16.mxu0 0
      %1152 = vmatpush1.bf16.msra.mxu0 0
      %1153 = vmatprep.subr.bf16.mxu0 0
      %1154 = vmatpush1.bf16.msra.mxu0 0
      %1155 = vmatprep.subr.bf16.mxu0 0
      %1156 = vmatpush1.bf16.msra.mxu0 0
      %1157 = vmatprep.mubr.bf16.mxu0 0
      %1158 = vmatmul.mubr.bf16.gmra.mrb[0].mxu0 %v1060
      %v1159 = vpop.f32.mrb[0].mxu0
      %v1160 = vadd.f32 %v625, %v1159
      %v1161 = vpop.f32.mrb[0].mxu0
      %v1162 = vpop.f32.mrb[0].mxu0
      %v1163 = vpop.f32.mrb[0].mxu0
      %1164 = vdwg.mxu0
      %s1165 = smul.u32 %s639, 8
      %s1166 = scalar_lea.vmem [#allocation6], %s1165
      %1167 = vst [vmem:[%s1166] sm:$0xff] %v1160
      %1168 = vmax.xlane.f32.xlu0 %v1160
      %v1169 = vpop.xlane.xlu0 %1168
      %vm1170 = vcmp.eq.f32.partialorder %v1160, %v1169
      %v1171 = vsel %vm1170, %v619, 128
      %v1172 = vand.u32 %v1171, 65535
      %v1173 = vshra.s32 %v1171, 16
      %v1174 = vcvt.s32.f32 %v1172
      %v1175 = vcvt.s32.f32 %v1173
      %1176 = vmin.xlane.f32.xlu0 %v1175
      %v1177 = vpop.xlane.xlu0 %1176
      %vm1178 = vcmp.eq.f32.partialorder %v1175, %v1177
      %v1179 = vsel %vm1178, %v1174, inf
      %1180 = vmin.xlane.f32.xlu0 %v1179
      %v1181 = vpop.xlane.xlu0 %1180
      %v1182 = vcvt.f32.s32 %v1181
      %v1183 = vcvt.f32.s32 %v1177
      %v1184 = vshll.u32 %v1183, 16
      %v1185 = vadd.s32 %v1184, %v1182
      %vm1186 = vcmp.eq.s32.totalorder %v619, %v1185
      %v1187 = vsel %vm1186, 1, 0
      %v1188 = vcvt.s32.f32 %v1187
      %s1189 = scalar_lea.vmem %s1, %s1165
      %v1190 = vld [vmem:[%s1189] sm:$0xff]
      %1191 = vset.pattern.permute.xlu0 0
      %1192 = vperm.xlu0 %1191, %v1190
      %v1193 = vpop.permute.xlu0 %1192
      %vm1194 = vcmp.eq.s32.totalorder %v619, %v1193
      %v1195 = vsel %vm1194, 1, 0
      %v1196 = vcvt.s32.f32 %v1195
      %s1197 = sld [smem:[#allocation3 + %s639]]
      %v1198 = vstv %s1197
      %v1199 = vmul.f32 %v1198, %v1196
      %s1200 = ssub.f32 1.0, %s1197
      %v1201 = vstv %s1200
      %v1202 = vmul.f32 %v1201, %v1188
      %v1203 = vadd.f32 %v1199, %v1202
      %v1204 = vpack.c.bf16 %v1203, %v1203
    $region50: #{seq2seq_forward.3} parent=1 // loop_footer
      %s643 = sadd.s32 1, %s639
    $region51: #{seq2seq_forward.3} parent=1 // loop_footer_branch
      %638 = sbr.rel target = $region47
    $region52: #{seq2seq_forward.3} parent=1 // loop_exit
      _
    // Predicated region
    $region53: #{seq2seq_forward.3} parent=1 // pred_check
      _
    $region54: #{seq2seq_forward.3} parent=1 // pred_check_branch
      %1206 = sbr.rel (0) target = $region56
    $region55: #{seq2seq_forward.3} parent=1 // pred_region
      %s1208 = ssub.s32 1024, 1024
      %1209 = vsyncadd [#allocation4], %s1208
      %s1210 = sshll.u32 [#allocation6], 4
      %s1211 = int_to_ptr.vmem [resolvable:$true] %s1210
      %1216 = dma.vmem_to_hbm [thread:$0]  %s1211, 1024, %s10, [#allocation4], 128, 128, 8
    $region56: #{seq2seq_forward.3} parent=1 // pred_fallthru
      _
    // Predicated region
    $region57: #{seq2seq_forward.3} parent=1 // pred_check
      _
    $region58: #{seq2seq_forward.3} parent=1 // pred_check_branch
      %1218 = sbr.rel (0) target = $region60
    $region59: #{seq2seq_forward.3} parent=1 // pred_region
      %1219 = dma.done [#allocation4], 1024
    $region60: #{seq2seq_forward.3} parent=1 // pred_fallthru
      _
    %1220 = vsyncpa [#allocation4], 1
    %1221 = vsyncpa [#allocation5], 1

</llo_original>
